<compile_context>
chip_gen: v5e
topology: v5e:2x2
jax: 0.10.0
libtpu: 0.0.40
codegen_flags: <defaults>
</compile_context>

<pallas_src>
import functools
import math
import random

import jax
import jax.numpy as jnp
from jax import lax
from jax.experimental import pallas as pl
from jax.experimental.pallas import tpu as pltpu


# =====================  tiling helpers  =====================

def _round_up(v, m):
    return (v + m - 1) // m * m


def _pick_tn(Np):
    if Np <= 512:
        return Np
    for t in (512, 384, 256, 128):
        if Np % t == 0:
            return t
    return 128


def _pick_tm(M, K, grid_n):
    """Full-M blocks avoid runtime padding; split M in two when the N grid is
    degenerate so both v7x TensorCores get work."""
    if grid_n >= 2 or M < 32:
        tm = M
    else:
        tm = _round_up((M + 1) // 2, 16)
    # VMEM guard: keep the bf16 x block under ~4 MiB (v7x has 64 MiB physical).
    while tm > 256 and tm * K * 2 > (4 << 20):
        tm = _round_up((tm + 1) // 2, 16)
    if tm >= M:
        return M, M
    return tm, _round_up(M, tm)


# =====================  Pallas kernels  =====================

def _matmul_bias_kernel(x_ref, w_ref, b_ref, o_ref, *, relu):
    # Single k-step (tk == K): no accumulator scratch; bias + ReLU fused.
    r = jnp.dot(x_ref[...], w_ref[...], preferred_element_type=jnp.float32)
    r = r + b_ref[...]
    if relu:
        r = jnp.maximum(r, 0.0)
    o_ref[...] = r.astype(o_ref.dtype)


def pallas_matmul_bias(x, pw, relu=False, out_dtype=jnp.bfloat16):
    """(M,K) @ exact-K bf16 weight (K,Np) + prepadded bias (1,Np); fused ReLU.

    Each weight block is streamed from HBM exactly once; no K padding of the
    im2col slab; output emitted in `out_dtype` (bf16 for activations)."""
    wm, bp = pw['wm'], pw['b']
    N = pw['b0'].shape[0]                       # true (unpadded) output width (static)
    M, K = x.shape
    Kw, Np = wm.shape
    assert K == Kw, (K, Kw)
    tn = _pick_tn(Np)
    grid_n = Np // tn
    tm, Mp = _pick_tm(M, K, grid_n)
    grid_m = Mp // tm

    xb = x.astype(jnp.bfloat16)
    if Mp != M:                                 # at most tm-1 rows; rare and tiny
        xb = jnp.pad(xb, ((0, Mp - M), (0, 0)))

    out = pl.pallas_call(
        functools.partial(_matmul_bias_kernel, relu=relu),
        out_shape=jax.ShapeDtypeStruct((Mp, Np), out_dtype),
        grid_spec=pltpu.PrefetchScalarGridSpec(
            num_scalar_prefetch=0,
            grid=(grid_m, grid_n),
            in_specs=[pl.BlockSpec((tm, K), lambda i, j: (i, 0)),
                      pl.BlockSpec((K, tn), lambda i, j: (0, j)),
                      pl.BlockSpec((1, tn), lambda i, j: (0, j))],
            out_specs=pl.BlockSpec((tm, tn), lambda i, j: (i, j))),
        compiler_params=pltpu.CompilerParams(
            dimension_semantics=("parallel", "parallel"),
            vmem_limit_bytes=32 * 1024 * 1024),
    )(xb, wm, bp)
    if Mp != M or Np != N:
        out = out[:M, :N]
    return out


def _absdiff_kernel(a_ref, b_ref, o_ref, *, nrows, block_rows, ragged):
    i = pl.program_id(0)

    @pl.when(i == 0)
    def _():
        o_ref[...] = jnp.zeros_like(o_ref)

    d = jnp.abs(a_ref[...].astype(jnp.float32) - b_ref[...].astype(jnp.float32))
    if ragged:
        row = i * block_rows + lax.broadcasted_iota(jnp.int32, d.shape, 0)
        d = jnp.where(row < nrows, d, 0.0)
    o_ref[...] += d


def pallas_mean_abs_diff(a, b):
    """mean(|a - b|): bf16 inputs, f32 accumulation, channels on the lane dim,
    no host-side padding (ragged tail masked inside the kernel)."""
    C = a.shape[-1]
    a2 = a.reshape(-1, C)
    b2 = b.reshape(-1, C)
    rows = a2.shape[0]
    if rows <= 4096:
        block_rows, grid, ragged = rows, 1, False
    else:
        block_rows = 4096
        grid = -(-rows // block_rows)
        ragged = (rows % block_rows) != 0
    partial = pl.pallas_call(
        functools.partial(_absdiff_kernel, nrows=rows,
                          block_rows=block_rows, ragged=ragged),
        out_shape=jax.ShapeDtypeStruct((block_rows, C), jnp.float32),
        grid_spec=pltpu.PrefetchScalarGridSpec(
            num_scalar_prefetch=0,
            grid=(grid,),
            in_specs=[pl.BlockSpec((block_rows, C), lambda i: (i, 0)),
                      pl.BlockSpec((block_rows, C), lambda i: (i, 0))],
            out_specs=pl.BlockSpec((block_rows, C), lambda i: (0, 0))),
        compiler_params=pltpu.CompilerParams(
            dimension_semantics=("arbitrary",),
            vmem_limit_bytes=32 * 1024 * 1024),
    )(a2, b2)
    return jnp.sum(partial) / (rows * C)


# =====================  weight prep (run once, outside jit)  =====================

def prep_conv(w, b):
    """w (Cout,Cin,kh,kw), b (Cout,) -> exact-K bf16 (K,Np) weight + (1,Np) f32 bias."""
    cout, cin, kh, kw = w.shape
    K = cin * kh * kw
    Np = _round_up(cout, 128)
    wm = jnp.pad(w.reshape(cout, K).T.astype(jnp.float32),
                 ((0, 0), (0, Np - cout))).astype(jnp.bfloat16)
    bp = jnp.pad(b.astype(jnp.float32), (0, Np - cout)).reshape(1, Np)
    # b0 kept unpadded: its (static) shape carries the true output width under jit.
    return {'wm': wm, 'b': bp, 'b0': b.astype(jnp.float32)}


def prep_linear(w, b):
    """w (out,in) torch layout -> exact-K bf16 (K,Np) weight + (1,Np) f32 bias."""
    out_f, in_f = w.shape
    Np = _round_up(out_f, 128)
    wm = jnp.pad(w.T.astype(jnp.float32),
                 ((0, 0), (0, Np - out_f))).astype(jnp.bfloat16)
    bp = jnp.pad(b.astype(jnp.float32), (0, Np - out_f)).reshape(1, Np)
    return {'wm': wm, 'b': bp, 'b0': b.astype(jnp.float32)}


# =====================  conv via Pallas matmul (NHWC)  =====================

def conv2d_multi(xs, pw, kh, kw, stride=1, padding=0, relu=False):
    """One conv (shared weights) applied to a LIST of NHWC tensors via a single
    Pallas matmul over the concatenated im2col row-slabs."""
    rows_list, metas = [], []
    for x in xs:
        xb = x.astype(jnp.bfloat16)
        N = x.shape[0]
        if kh == 1 and kw == 1 and stride == 1:
            # 1x1 conv: im2col is the identity -> (optionally pad) and reshape.
            if padding:
                xb = jnp.pad(xb, ((0, 0), (padding, padding),
                                  (padding, padding), (0, 0)))
            Ho, Wo, C = xb.shape[1], xb.shape[2], xb.shape[3]
            rows = xb.reshape(N * Ho * Wo, C)
        else:
            patches = lax.conv_general_dilated_patches(
                xb, (kh, kw), (stride, stride),
                [(padding, padding), (padding, padding)],
                dimension_numbers=("NHWC", "HWIO", "NHWC"))
            # feature order is channel-major (Cin, kh, kw) -> matches prep_conv
            # (verified at startup against lax.conv_general_dilated).
            _, Ho, Wo, F = patches.shape
            rows = patches.reshape(N * Ho * Wo, F)
        rows_list.append(rows)
        metas.append((N, Ho, Wo))
    rows_all = rows_list[0] if len(rows_list) == 1 else jnp.concatenate(rows_list, 0)
    out = pallas_matmul_bias(rows_all, pw, relu=relu)     # bf16
    cout = pw['b0'].shape[0]
    outs, off = [], 0
    for (N, Ho, Wo) in metas:
        cnt = N * Ho * Wo
        outs.append(out[off:off + cnt].reshape(N, Ho, Wo, cout))
        off += cnt
    return outs


def conv2d(x, pw, kh, kw, stride=1, padding=0, relu=False):
    return conv2d_multi([x], pw, kh, kw, stride, padding, relu)[0]


# =====================  JAX glue (pool / resize / pyramid), NHWC  =====================

def maxpool2d(x, kernel_size, stride, padding=0):
    return lax.reduce_window(
        x, jnp.array(-jnp.inf, dtype=x.dtype), lax.max,
        window_dimensions=(1, kernel_size, kernel_size, 1),
        window_strides=(1, stride, stride, 1),
        padding=((0, 0), (padding, padding), (padding, padding), (0, 0)))


def bilinear_resize(x, out_h, out_w):
    """F.interpolate(mode='bilinear', align_corners=False) equivalent, NHWC."""
    N, H, W, C = x.shape
    if (H, W) == (out_h, out_w):
        return x
    orig_dtype = x.dtype
    xf = x.astype(jnp.float32)

    def src_idx(out_size, in_size):
        scale = in_size / out_size
        idx = (jnp.arange(out_size, dtype=jnp.float32) + 0.5) * scale - 0.5
        idx = jnp.maximum(idx, 0.0)
        i0 = jnp.floor(idx)
        frac = idx - i0
        i0 = jnp.minimum(i0.astype(jnp.int32), in_size - 1)
        i1 = jnp.minimum(i0 + 1, in_size - 1)
        return i0, i1, frac

    y0, y1, wy = src_idx(out_h, H)
    x0, x1, wx = src_idx(out_w, W)
    top = xf[:, y0, :, :]
    bot = xf[:, y1, :, :]
    rows = top * (1.0 - wy)[None, :, None, None] + bot * wy[None, :, None, None]
    left = rows[:, :, x0, :]
    right = rows[:, :, x1, :]
    out = left * (1.0 - wx)[None, None, :, None] + right * wx[None, None, :, None]
    return out.astype(orig_dtype)


def pad_to_size(x, size):
    H, W = x.shape[1], x.shape[2]
    ph, pw = size[0] - H, size[1] - W
    top, left = ph // 2, pw // 2
    return jnp.pad(x, ((0, 0), (top, ph - top), (left, pw - left), (0, 0)))


def center_crop(x, size):
    H, W = x.shape[1], x.shape[2]
    top, left = (H - size) // 2, (W - size) // 2
    return x[:, top:top + size, left:left + size, :]


def get_ip_scales(num_scale_bands, base_image_size, scale=4):
    # TODO(synk): original get_ip_scales not provided; reconstructed as an
    # odd-length 2^(i/scale) pyramid centered on the base size.
    if num_scale_bands <= 1:
        return [int(base_image_size)]
    if num_scale_bands % 2 == 0:
        num_scale_bands += 1
    c = num_scale_bands // 2
    scales = [int(math.ceil(base_image_size * (2.0 ** (i / scale))))
              for i in range(-c, c + 1)]
    return sorted(scales, reverse=True)


def make_ip(x, num_scale_bands):
    base = int(x.shape[2])
    scales = get_ip_scales(num_scale_bands, base, 4)
    if len(scales) > 1:
        return [bilinear_resize(x, s, s) for s in scales]
    return [x]


# =====================  Model pieces  =====================

def conv_scoring(x, ps):
    # TODO(synk): ConvScoring reconstructed as 1x1 conv -> global max pool.
    s = conv2d(x, ps, 1, 1, stride=1, padding=0, relu=False)        # (N,H,W,1) bf16
    return jnp.max(s.astype(jnp.float32), axis=(1, 2))              # (N,1) f32


def soft_selection(scores, feats):
    # scores (N,2,1) f32, feats (N,2,H,W,C): softmax-weighted sum over the 2 scales.
    w = jax.nn.softmax(scores.astype(jnp.float32), axis=1)[:, :, :, None, None]
    out = jnp.sum(w * feats.astype(jnp.float32), axis=1)
    return out.astype(feats.dtype)


def c_scoring2_forward(pyr, pr1, pr2, ps, pool1, pool2, skip, k1, k2):
    if len(pyr) == 1:
        return [pool2(pyr[0])]
    mid = pool2(pyr[len(pyr) // 2])
    fh, fw = mid.shape[1], mid.shape[2]
    cands = []
    for i in range(0, len(pyr) - 1, skip):
        cands.append(bilinear_resize(pool1(pyr[i]), fh, fw))
        cands.append(bilinear_resize(pool2(pyr[i + 1]), fh, fw))
    # All scale candidates share the resizing / scoring weights -> batch them
    # along N so each conv weight is touched once.
    batched = jnp.concatenate(cands, axis=0)
    h = conv2d(batched, pr1, k1, k1, stride=1, padding=1, relu=True)
    h = conv2d(h, pr2, k2, k2, stride=1, padding=1, relu=False)
    scores = conv_scoring(h, ps)                  # (n_cand*N, 1)
    N = pyr[0].shape[0]
    out = []
    for p_i in range(len(cands) // 2):
        a0, a1, a2 = 2 * p_i * N, (2 * p_i + 1) * N, (2 * p_i + 2) * N
        sc = jnp.stack([scores[a0:a1], scores[a1:a2]], axis=1)   # (N,2,1)
        ft = jnp.stack([h[a0:a1], h[a1:a2]], axis=1)             # (N,2,H,W,C)
        out.append(soft_selection(sc, ft))
    return out


def backbone(x, p, num_scale_bands):
    """ALEXMAX_v3_4 up to the classifier (NHWC); returns (flatten, c1[0], c2[0])."""
    pyr = make_ip(x, num_scale_bands)
    # S1: Conv(3->96, k11, s4) + ReLU  (BatchNorm omitted: identity at init)
    s1 = conv2d_multi(pyr, p['s1'], 11, 11, stride=4, padding=0, relu=True)
    c1 = c_scoring2_forward(
        s1, p['c1_resize1'], p['c1_resize2'], p['c1_score'],
        pool1=lambda t: maxpool2d(t, 3, 2),
        pool2=lambda t: maxpool2d(t, 4, 3),
        skip=1, k1=1, k2=3)
    # S2: Conv(96->256, k3, s1, pad2) + ReLU
    s2 = conv2d_multi(c1, p['s2'], 3, 3, stride=1, padding=2, relu=True)
    c2 = c_scoring2_forward(
        s2, p['c2_resize1'], p['c2_resize2'], p['c2_score'],
        pool1=lambda t: maxpool2d(t, 3, 2, padding=1),
        pool2=lambda t: maxpool2d(t, 6, 2),
        skip=2, k1=3, k2=1)
    # S3: 256->384->384->256, k3 pad1, ReLU each
    h = conv2d_multi(c2, p['s3_1'], 3, 3, stride=1, padding=1, relu=True)
    h = conv2d_multi(h, p['s3_2'], 3, 3, stride=1, padding=1, relu=True)
    h = conv2d_multi(h, p['s3_3'], 3, 3, stride=1, padding=1, relu=True)
    # global pool: C(global_scale_pool=True) single-scale branch = MaxPool(3,2)
    # TODO(synk): multi-scale branch of the original C module not needed here.
    pooled = maxpool2d(h[0], 3, 2)
    # flatten in torch (C,H,W) order for fidelity
    flat = jnp.transpose(pooled, (0, 3, 1, 2)).reshape(pooled.shape[0], -1)
    return flat, c1[0], c2[0]


def classifier(flat, p):
    # Dropout = identity (eval mode). Linear -> ReLU, Linear -> ReLU, Linear.
    h = pallas_matmul_bias(flat, p['fc'], relu=True)                 # bf16
    h = pallas_matmul_bias(h, p['fc1'], relu=True)                   # bf16
    return pallas_matmul_bias(h, p['fc2'], relu=False, out_dtype=jnp.float32)


@functools.partial(jax.jit, static_argnames=("scale_factor", "ip_scale_bands"))
def chalexmax_forward(x_nchw, params, scale_factor, ip_scale_bands):
    img_hw = int(x_nchw.shape[-1])
    x = jnp.transpose(x_nchw, (0, 2, 3, 1)).astype(jnp.float32)   # NHWC
    nb = x.shape[0]

    # ---- rescale input for stream 2, pad-or-crop back to original size ----
    new_hw = int(img_hw * scale_factor)
    x_rs = bilinear_resize(x, new_hw, new_hw)
    if new_hw <= img_hw:
        x_rs = pad_to_size(x_rs, (img_hw, img_hw))
    else:
        x_rs = center_crop(x_rs, img_hw)

    main_scales = get_ip_scales(2, img_hw, 4)
    ip_scales = get_ip_scales(ip_scale_bands, img_hw, 4)

    if main_scales == ip_scales:
        # Both streams share the pyramid structure -> run backbone + classifier
        # ONCE on the batch-concatenated streams (every weight is streamed from
        # HBM a single time, bigger M feeds the MXU / both v7x cores).
        xb = jnp.concatenate([x, x_rs], axis=0)
        flat, c1f, c2f = backbone(xb, params, 2)
        logits = classifier(flat, params)
        out1, out2 = logits[:nb], logits[nb:]
        c1_1, c1_2 = c1f[:nb], c1f[nb:]
        c2_1, c2_2 = c2f[:nb], c2f[nb:]
    else:
        # TODO(synk): if this branch is ever hot, batch the two backbone passes
        # layer-by-layer where spatial shapes match to restore stream-once weights.
        flat1, c1_1, c2_1 = backbone(x, params, 2)
        flat2, c1_2, c2_2 = backbone(x_rs, params, ip_scale_bands)
        if flat1.shape[1] == flat2.shape[1]:
            logits = classifier(jnp.concatenate([flat1, flat2], axis=0), params)
            out1, out2 = logits[:nb], logits[nb:]
        else:
            out1 = classifier(flat1, params)
            out2 = classifier(flat2, params)

    c1_loss = pallas_mean_abs_diff(c1_1, c1_2)
    c2_loss = pallas_mean_abs_diff(c2_1, c2_2)
    # logits loss: 32 elements -> plain fused XLA, a pallas_call would be pure overhead
    out_loss = jnp.mean(jnp.abs(out1.astype(jnp.float32) - out2.astype(jnp.float32)))
    correct_scale_loss = c1_loss + c2_loss + 0.1 * out_loss
    return out1, correct_scale_loss


# =====================  Parameter init (deterministic)  =====================

def _conv_p(key, cout, cin, kh, kw):
    fan_in = cin * kh * kw
    w = jax.random.normal(key, (cout, cin, kh, kw), jnp.float32) / math.sqrt(fan_in)
    return {'w': w, 'b': jnp.zeros((cout,), jnp.float32)}


def _lin_p(key, out, inp):
    w = jax.random.normal(key, (out, inp), jnp.float32) / math.sqrt(inp)
    return {'w': w, 'b': jnp.zeros((out,), jnp.float32)}


def init_conv_params(key):
    ks = jax.random.split(key, 11)
    return {
        's1': _conv_p(ks[0], 96, 3, 11, 11),
        'c1_resize1': _conv_p(ks[1], 96, 96, 1, 1),
        'c1_resize2': _conv_p(ks[2], 96, 96, 3, 3),
        'c1_score': _conv_p(ks[3], 1, 96, 1, 1),
        's2': _conv_p(ks[4], 256, 96, 3, 3),
        'c2_resize1': _conv_p(ks[5], 256, 256, 3, 3),
        'c2_resize2': _conv_p(ks[6], 256, 256, 1, 1),
        'c2_score': _conv_p(ks[7], 1, 256, 1, 1),
        's3_1': _conv_p(ks[8], 384, 256, 3, 3),
        's3_2': _conv_p(ks[9], 384, 384, 3, 3),
        's3_3': _conv_p(ks[10], 256, 384, 3, 3),
    }


def init_fc_params(key, classifier_input_size, num_classes):
    k1, k2, k3 = jax.random.split(key, 3)
    return {
        'fc': _lin_p(k1, 4096, classifier_input_size),
        'fc1': _lin_p(k2, 4096, 4096),
        'fc2': _lin_p(k3, num_classes, 4096),
    }


# =====================  main  =====================

if __name__ == "__main__":
    NUM_CLASSES = 16
    IP_SCALE_BANDS = 2          # >1 so contrastive feature shapes match between streams

    x = jax.random.normal(jax.random.PRNGKey(0), (2, 3, 64, 64), jnp.float32)

    # conv weights -> matmul-ready exact-K bf16 weights (done once, outside jit)
    conv_raw = init_conv_params(jax.random.PRNGKey(1))
    params = {k: prep_conv(v['w'], v['b']) for k, v in conv_raw.items()}

    # --- correctness self-check: im2col feature ordering vs lax.conv (review item) ---
    chk_x = jax.random.normal(jax.random.PRNGKey(3), (1, 8, 8, 96), jnp.float32)
    chk_w = conv_raw['s2']['w']
    ref = lax.conv_general_dilated(
        chk_x.astype(jnp.bfloat16),
        jnp.transpose(chk_w, (2, 3, 1, 0)).astype(jnp.bfloat16),
        window_strides=(1, 1), padding=[(2, 2), (2, 2)],
        dimension_numbers=("NHWC", "HWIO", "NHWC"),
        preferred_element_type=jnp.float32)
    ref = jnp.maximum(ref + conv_raw['s2']['b'], 0.0)
    got = conv2d(chk_x, params['s2'], 3, 3, stride=1, padding=2,
                 relu=True).astype(jnp.float32)
    assert bool(jnp.allclose(got, ref, atol=0.1, rtol=0.1)), "im2col ordering mismatch"

    # classifier_input_size derived from the backbone output shape
    flat_sds = jax.eval_shape(
        lambda inp: backbone(inp, params, 2)[0],
        jax.ShapeDtypeStruct((2, 64, 64, 3), jnp.float32))
    classifier_input_size = int(flat_sds.shape[1])

    fc_raw = init_fc_params(jax.random.PRNGKey(2),
                            classifier_input_size, NUM_CLASSES)
    params['fc'] = prep_linear(fc_raw['fc']['w'], fc_raw['fc']['b'])
    params['fc1'] = prep_linear(fc_raw['fc1']['w'], fc_raw['fc1']['b'])
    params['fc2'] = prep_linear(fc_raw['fc2']['w'], fc_raw['fc2']['b'])

    # deterministic replacement for random.choice of the scale factor
    random.seed(0)
    scale_factor = random.choice([0.49, 0.59, 0.707, 0.841, 1, 1.189, 1.414])

    out, correct_scale_loss = chalexmax_forward(
        x, params, scale_factor=float(scale_factor),
        ip_scale_bands=IP_SCALE_BANDS)
    out = jax.block_until_ready(out)
    correct_scale_loss = jax.block_until_ready(correct_scale_loss)

    assert out.shape == (2, NUM_CLASSES)
    assert correct_scale_loss.shape == ()
    assert bool(jnp.isfinite(out).all()) and bool(jnp.isfinite(correct_scale_loss))
    print("KERNEL_OK")
</pallas_src>

<mosaic_0001>
module attributes {stable_mosaic.version = 11 : i64} {
  func.func @_matmul_bias_kernel(%arg0: i32, %arg1: i32, %arg2: memref<64x864xbf16, #tpu.memory_space<vmem>>, %arg3: memref<864x256xbf16, #tpu.memory_space<vmem>>, %arg4: memref<1x256xf32, #tpu.memory_space<vmem>>, %arg5: memref<64x256xbf16, #tpu.memory_space<vmem>>) attributes {dimension_semantics = [#tpu.dimension_semantics<parallel>, #tpu.dimension_semantics<parallel>], iteration_bounds = array<i64: 2, 1>, scalar_prefetch = 0 : i64, scratch_operands = 0 : i64, tpu.core_type = #tpu.core_type<tc>, window_params = [{transform_indices = @transform_0, window_bounds = array<i64: 64, 864>}, {transform_indices = @transform_1, window_bounds = array<i64: 864, 256>}, {transform_indices = @transform_2, window_bounds = array<i64: 1, 256>}, {transform_indices = @transform_3, window_bounds = array<i64: 64, 256>}]} {
    %c0 = arith.constant 0 : index
    %c0_0 = arith.constant 0 : index
    %0 = vector.load %arg2[%c0, %c0_0] : memref<64x864xbf16, #tpu.memory_space<vmem>>, vector<64x864xbf16>
    %c0_1 = arith.constant 0 : index
    %c0_2 = arith.constant 0 : index
    %1 = vector.load %arg3[%c0_1, %c0_2] : memref<864x256xbf16, #tpu.memory_space<vmem>>, vector<864x256xbf16>
    %cst = arith.constant dense<0.000000e+00> : vector<64x256xf32>
    %2 = tpu.matmul %0, %1, %cst {dimension_numbers = #tpu.dot_dimension_numbers<[1], [0], [0], [1], [0, 0, 1, 1], [], []>} : vector<64x864xbf16>, vector<864x256xbf16>, vector<64x256xf32> -> vector<64x256xf32>
    %c0_3 = arith.constant 0 : index
    %c0_4 = arith.constant 0 : index
    %3 = vector.load %arg4[%c0_3, %c0_4] : memref<1x256xf32, #tpu.memory_space<vmem>>, vector<1x256xf32>
    %4 = vector.broadcast %3 : vector<1x256xf32> to vector<64x256xf32>
    %5 = arith.addf %2, %4 : vector<64x256xf32>
    %cst_5 = arith.constant 0.000000e+00 : f32
    %6 = vector.broadcast %cst_5 : f32 to vector<64x256xf32>
    %7 = arith.maximumf %5, %6 : vector<64x256xf32>
    %8 = arith.truncf %7 : vector<64x256xf32> to vector<64x256xbf16>
    %c0_6 = arith.constant 0 : index
    %c0_7 = arith.constant 0 : index
    %9 = vector.load %arg5[%c0_6, %c0_7] : memref<64x256xbf16, #tpu.memory_space<vmem>>, vector<64x256xbf16>
    tpu.vector_store %arg5[%c0_6, %c0_7], %8 {strides = array<i32>} : memref<64x256xbf16, #tpu.memory_space<vmem>>, vector<64x256xbf16>,
    return
  }
  func.func @transform_0(%arg0: i32, %arg1: i32) -> (i32, i32) {
    %c0_i32 = arith.constant 0 : i32
    %c0_i32_0 = arith.constant 0 : i32
    return %arg0, %c0_i32 : i32, i32
  }
  func.func @transform_1(%arg0: i32, %arg1: i32) -> (i32, i32) {
    %c0_i32 = arith.constant 0 : i32
    %c0_i32_0 = arith.constant 0 : i32
    return %c0_i32, %arg1 : i32, i32
  }
  func.func @transform_2(%arg0: i32, %arg1: i32) -> (i32, i32) {
    %c0_i32 = arith.constant 0 : i32
    %c0_i32_0 = arith.constant 0 : i32
    return %c0_i32, %arg1 : i32, i32
  }
  func.func @transform_3(%arg0: i32, %arg1: i32) -> (i32, i32) {
    %c0_i32 = arith.constant 0 : i32
    return %arg0, %arg1 : i32, i32
  }
}

</mosaic_0001>

<llo_original>
// kernel: tpu_custom_call.1
$region0: #{tpu_custom_call.1}
  #allocation0 [shape = 'u32[]', space=smem, size = 0x4, offset = 0x4, fixed_abs, tag = 'smem constant byte address 0x4 - core index']
  #allocation1 [shape = 'u32[72,128]{1,0:T(1,128)}', space=vmem, size = 0x9000, scoped, tag = 'internal scratch']
  %s0 = inlined_call_operand.vmem [shape: bf16[128,864], index: 0, kind: input, shape index: {}]
  %s1 = inlined_call_operand.vmem [shape: bf16[864,256], index: 1, kind: input, shape index: {}]
  %s2 = inlined_call_operand.vmem [shape: f32[1,256], index: 2, kind: input, shape index: {}]
  %s3 = inlined_call_operand.hbm [shape: bf16[128,256], index: 3, kind: output, shape index: {}]
  %s4 = sld [smem:[#allocation0]]
  $region45: #{tpu_custom_call.1} parent=0
    _
  %s6 = ssub.s32 1, %s4
  %s7 = scalar_select 0, %s6, %s4
  $region1: #{tpu_custom_call.1} parent=0
    #allocation2 [shape = 'u8[65536]{0}', space=vmem, size = 0x10000, scoped, tag = 'output window, operand 0']
    #allocation3 [shape = 's32[2]{0}', space=sflag, size = 0x8, scoped, tag = 'scoped memory for tpu_custom_call.1']
    %8 = vsyncpa [#allocation3], 0
    %s9 = scalar_lea.sflag [#allocation3], 1
    %10 = vsyncpa %s9, 0
    loop: start=0, step=1, limit=4
    $region2: #{tpu_custom_call.1} parent=1 // loop_pre_header
      _
    $region3: #{tpu_custom_call.1} parent=1 // loop_header
      %s12 = sphi 0, %s16
      %p13 = scmp.ge.s32.totalorder %s12, 4
      %s19 = sphi 0, %s31
      %s20 = sphi 0, %s27
      %s21 = sphi 0, %s19
      %s22 = sphi 0, %s20
      %s23 = sphi 0, %s21
      %s24 = sphi 0, %s22
      %s34 = sphi 0, %s36
      %s37 = sphi 0, %s34
      %s38 = sphi 0, %s37
      %s54 = sphi 0, %s38
      %s60 = sphi 0, %s62
      %s63 = sphi 0, %s60
      %s64 = sphi 0, %s63
      %s80 = sphi 0, %s64
      %s86 = sphi 0, %s88
      %s89 = sphi 0, %s86
      %s90 = sphi 0, %s89
      %s106 = sphi 0, %s90
      %s114 = sphi 0, %s116
      %s117 = sphi 0, %s114
      %s118 = sphi 0, %s117
      %s134 = sphi 0, %s118
    $region4: #{tpu_custom_call.1} parent=1 // loop_header_branch
      %15 = sbr.rel (%p13) target = $region8
    $region5: #{tpu_custom_call.1} parent=1 // loop_body
      %s17 = ssub.s32 %s12, 1
      %s18 = ssub.s32 %s12, 2
      %s25 = sadd.s32 1, %s20
      %p26 = scmp.ge.s32.totalorder %s25, 1
      %s27 = scalar_select %p26, 0, %s25
      %s28 = sadd.s32 1, %s19
      %s29 = scalar_select %p26, %s28, %s19
      %p30 = scmp.ge.s32.totalorder %s29, 2
      %s31 = scalar_select %p30, 0, %s29
      %s32 = ssub.s32 %s19, %s31
      %p33 = scmp.eq.s32.totalorder %s32, 0
      %s35 = sadd.s32 %s34, 1
      %s36 = scalar_select %p33, %s34, %s35
      %p39 = pneg %p33
      %p40 = scmp.eq.s32.totalorder %s12, 1
      %p41 = por %p39, %p40
      %p42 = scmp.ne.s32.totalorder %s34, %s37
      %p43 = scmp.eq.s32.totalorder %s12, 0
      %p44 = por %p42, %p43
      %p45 = scmp.ne.s32.totalorder %s34, %s37
      %p46 = scmp.eq.s32.totalorder %s17, 1
      %p47 = por %p45, %p46
      %p48 = scmp.ne.s32.totalorder %s37, %s38
      %p49 = scmp.eq.s32.totalorder %s17, 0
      %p50 = por %p48, %p49
      %p51 = scmp.ne.s32.totalorder %s37, %s38
      %p52 = scmp.eq.s32.totalorder %s18, 1
      %p53 = por %p51, %p52
      %p55 = scmp.ne.s32.totalorder %s38, %s54
      %p56 = scmp.eq.s32.totalorder %s18, 0
      %p57 = por %p55, %p56
      %s58 = ssub.s32 %s20, %s27
      %p59 = scmp.eq.s32.totalorder %s58, 0
      %s61 = sadd.s32 %s60, 1
      %s62 = scalar_select %p59, %s60, %s61
      %p65 = pneg %p59
      %p66 = scmp.eq.s32.totalorder %s12, 1
      %p67 = por %p65, %p66
      %p68 = scmp.ne.s32.totalorder %s60, %s63
      %p69 = scmp.eq.s32.totalorder %s12, 0
      %p70 = por %p68, %p69
      %p71 = scmp.ne.s32.totalorder %s60, %s63
      %p72 = scmp.eq.s32.totalorder %s17, 1
      %p73 = por %p71, %p72
      %p74 = scmp.ne.s32.totalorder %s63, %s64
      %p75 = scmp.eq.s32.totalorder %s17, 0
      %p76 = por %p74, %p75
      %p77 = scmp.ne.s32.totalorder %s63, %s64
      %p78 = scmp.eq.s32.totalorder %s18, 1
      %p79 = por %p77, %p78
      %p81 = scmp.ne.s32.totalorder %s64, %s80
      %p82 = scmp.eq.s32.totalorder %s18, 0
      %p83 = por %p81, %p82
      %s84 = ssub.s32 %s20, %s27
      %p85 = scmp.eq.s32.totalorder %s84, 0
      %s87 = sadd.s32 %s86, 1
      %s88 = scalar_select %p85, %s86, %s87
      %p91 = pneg %p85
      %p92 = scmp.eq.s32.totalorder %s12, 1
      %p93 = por %p91, %p92
      %p94 = scmp.ne.s32.totalorder %s86, %s89
      %p95 = scmp.eq.s32.totalorder %s12, 0
      %p96 = por %p94, %p95
      %p97 = scmp.ne.s32.totalorder %s86, %s89
      %p98 = scmp.eq.s32.totalorder %s17, 1
      %p99 = por %p97, %p98
      %p100 = scmp.ne.s32.totalorder %s89, %s90
      %p101 = scmp.eq.s32.totalorder %s17, 0
      %p102 = por %p100, %p101
      %p103 = scmp.ne.s32.totalorder %s89, %s90
      %p104 = scmp.eq.s32.totalorder %s18, 1
      %p105 = por %p103, %p104
      %p107 = scmp.ne.s32.totalorder %s90, %s106
      %p108 = scmp.eq.s32.totalorder %s18, 0
      %p109 = por %p107, %p108
      %s110 = ssub.s32 %s19, %s31
      %s111 = ssub.s32 %s20, %s27
      %s112 = sor.u32 %s110, %s111
      %p113 = scmp.eq.s32.totalorder %s112, 0
      %s115 = sadd.s32 %s114, 1
      %s116 = scalar_select %p113, %s114, %s115
      %p119 = pneg %p113
      %p120 = scmp.eq.s32.totalorder %s12, 1
      %p121 = por %p119, %p120
      %p122 = scmp.ne.s32.totalorder %s114, %s117
      %p123 = scmp.eq.s32.totalorder %s12, 0
      %p124 = por %p122, %p123
      %p125 = scmp.ne.s32.totalorder %s114, %s117
      %p126 = scmp.eq.s32.totalorder %s17, 1
      %p127 = por %p125, %p126
      %p128 = scmp.ne.s32.totalorder %s117, %s118
      %p129 = scmp.eq.s32.totalorder %s17, 0
      %p130 = por %p128, %p129
      %p131 = scmp.ne.s32.totalorder %s117, %s118
      %p132 = scmp.eq.s32.totalorder %s18, 1
      %p133 = por %p131, %p132
      %p135 = scmp.ne.s32.totalorder %s118, %s134
      %p136 = scmp.eq.s32.totalorder %s18, 0
      %p137 = por %p135, %p136
      %p138 = scmp.le.s32.totalorder 1, %s12
      %p139 = scmp.lt.s32.totalorder %s12, 3
      %p140 = pnand %p138, %p139
      %p141 = pneg %p140
      // Predicated region
      $region9: #{tpu_custom_call.1} parent=5 // pred_check
        _
      $region10: #{tpu_custom_call.1} parent=5 // pred_check_branch
        %143 = sbr.rel (%p140) target = $region12
      $region11: #{tpu_custom_call.1} parent=5 // pred_region
        %s144 = ssub.s32 %s12, 1
        // Predicated region
        $region13: #{tpu_custom_call.1} parent=11 // pred_check
          %p145 = pneg %p76
        $region14: #{tpu_custom_call.1} parent=11 // pred_check_branch
          %147 = sbr.rel (%p145) target = $region16
        $region15: #{tpu_custom_call.1} parent=11 // pred_region
          %s148 = smul.u32 2, %s22
          %p149 = scmp.lt.s32.totalorder %s148, 1
          %s150 = scalar_select %p149, %s148, 1
          %s151 = smul.addr %s150, 4
          %s152 = scalar_lea.vmem %s1, %s151
          %s153 = smul.u32 2, %s22
        $region16: #{tpu_custom_call.1} parent=11 // pred_fallthru
          _
        // Predicated region
        $region17: #{tpu_custom_call.1} parent=11 // pred_check
          %p154 = pneg %p102
        $region18: #{tpu_custom_call.1} parent=11 // pred_check_branch
          %156 = sbr.rel (%p154) target = $region20
        $region19: #{tpu_custom_call.1} parent=11 // pred_region
          %s157 = smul.u32 2, %s22
          %p158 = scmp.lt.s32.totalorder %s157, 1
          %s159 = scalar_select %p158, %s157, 1
          %s160 = scalar_lea.vmem %s2, %s159
          %s161 = smul.u32 2, %s22
        $region20: #{tpu_custom_call.1} parent=11 // pred_fallthru
          _
      $region12: #{tpu_custom_call.1} parent=5 // pred_fallthru
        _
      %p162 = scmp.lt.s32.totalorder %s12, 2
      // Predicated region
      $region21: #{tpu_custom_call.1} parent=5 // pred_check
        %p163 = pneg %p162
      $region22: #{tpu_custom_call.1} parent=5 // pred_check_branch
        %165 = sbr.rel (%p163) target = $region24
      $region23: #{tpu_custom_call.1} parent=5 // pred_region
        // Predicated region
        $region25: #{tpu_custom_call.1} parent=23 // pred_check
          %p166 = pneg %p44
        $region26: #{tpu_custom_call.1} parent=23 // pred_check_branch
          %168 = sbr.rel (%p166) target = $region28
        $region27: #{tpu_custom_call.1} parent=23 // pred_region
          %s169 = smul.u32 8, %s19
          %p170 = scmp.lt.s32.totalorder %s169, 15
          %s171 = scalar_select %p170, %s169, 15
          %s172 = smul.addr %s171, 7
          %s173 = smul.addr %s172, 4
          %s174 = scalar_lea.vmem %s0, %s173
          %s175 = smul.u32 8, %s19
        $region28: #{tpu_custom_call.1} parent=23 // pred_fallthru
          _
      $region24: #{tpu_custom_call.1} parent=5 // pred_fallthru
        _
      %p176 = scmp.le.s32.totalorder 1, %s12
      %p177 = scmp.lt.s32.totalorder %s12, 3
      %p178 = pnand %p176, %p177
      %p179 = pneg %p178
      // Predicated region
      $region29: #{tpu_custom_call.1} parent=5 // pred_check
        _
      $region30: #{tpu_custom_call.1} parent=5 // pred_check_branch
        %181 = sbr.rel (%p178) target = $region32
      $region31: #{tpu_custom_call.1} parent=5 // pred_region
        %s182 = ssub.s32 %s12, 1
        %s183 = smul.u32 8, %s21
        %p184 = scmp.lt.s32.totalorder %s183, 15
        %s185 = scalar_select %p184, %s183, 15
        %s186 = smul.addr %s185, 7
        %s187 = smul.addr %s186, 4
        %s188 = scalar_lea.vmem %s0, %s187
        %p189 = pneg %p50
        %p190 = pneg %p47
        %s191 = smul.u32 2, %s22
        %p192 = scmp.lt.s32.totalorder %s191, 1
        %s193 = scalar_select %p192, %s191, 1
        %s194 = smul.addr %s193, 4
        %s195 = scalar_lea.vmem %s1, %s194
        %p196 = pneg %p76
        %p197 = pneg %p73
        %s198 = smul.u32 2, %s22
        %p199 = scmp.lt.s32.totalorder %s198, 1
        %s200 = scalar_select %p199, %s198, 1
        %s201 = scalar_lea.vmem %s2, %s200
        %p202 = pneg %p102
        %p203 = pneg %p99
        %p204 = pneg %p130
        %p205 = pneg %p127
        %s206 = sand.u32 %s117, 1
        %s207 = scalar_lea.sflag [#allocation3], %s206
        %s208 = sand.u32 %s117, 1
        %s209 = smul.addr %s208, 64
        %s210 = scalar_lea.vmem [#allocation2], %s209
        %s211 = smul.u32 8, %s21
        %p212 = scmp.lt.s32.totalorder %s211, 15
        %s213 = scalar_select %p212, %s211, 15
        %s214 = smul.addr %s213, 7
        %s215 = smul.addr %s214, 4
        %s216 = scalar_lea.vmem %s0, %s215
        %s217 = smul.u32 8, %s21
        %s218 = smul.u32 2, %s22
        %p219 = scmp.lt.s32.totalorder %s218, 1
        %s220 = scalar_select %p219, %s218, 1
        %s221 = smul.addr %s220, 4
        %s222 = scalar_lea.vmem %s1, %s221
        %s223 = smul.u32 2, %s22
        %s224 = smul.u32 2, %s22
        %p225 = scmp.lt.s32.totalorder %s224, 1
        %s226 = scalar_select %p225, %s224, 1
        %s227 = scalar_lea.vmem %s2, %s226
        %s228 = smul.u32 2, %s22
        %s229 = smul.u32 8, %s21
        %s230 = smul.u32 2, %s22
        %v232 = vld [vmem:[%s216] sm:$0xff]
        %v233 = vld [vmem:[%s216 + $0x8] sm:$0xff]
        %v234 = vld [vmem:[%s216 + $0x10] sm:$0xff]
        %v235 = vld [vmem:[%s216 + $0x18] sm:$0xf]
        %v236 = vld [vmem:[%s216 + $0x1c] sm:$0xff]
        %v237 = vld [vmem:[%s216 + $0x24] sm:$0xff]
        %v238 = vld [vmem:[%s216 + $0x2c] sm:$0xff]
        %v239 = vld [vmem:[%s216 + $0x34] sm:$0xf]
        %v240 = vld [vmem:[%s216 + $0x38] sm:$0xff]
        %v241 = vld [vmem:[%s216 + $0x40] sm:$0xff]
        %v242 = vld [vmem:[%s216 + $0x48] sm:$0xff]
        %v243 = vld [vmem:[%s216 + $0x50] sm:$0xf]
        %v244 = vld [vmem:[%s216 + $0x54] sm:$0xff]
        %v245 = vld [vmem:[%s216 + $0x5c] sm:$0xff]
        %v246 = vld [vmem:[%s216 + $0x64] sm:$0xff]
        %v247 = vld [vmem:[%s216 + $0x6c] sm:$0xf]
        %v248 = vld [vmem:[%s216 + $0x70] sm:$0xff]
        %v249 = vld [vmem:[%s216 + $0x78] sm:$0xff]
        %v250 = vld [vmem:[%s216 + $0x80] sm:$0xff]
        %v251 = vld [vmem:[%s216 + $0x88] sm:$0xf]
        %v252 = vld [vmem:[%s216 + $0x8c] sm:$0xff]
        %v253 = vld [vmem:[%s216 + $0x94] sm:$0xff]
        %v254 = vld [vmem:[%s216 + $0x9c] sm:$0xff]
        %v255 = vld [vmem:[%s216 + $0xa4] sm:$0xf]
        %v256 = vld [vmem:[%s216 + $0xa8] sm:$0xff]
        %v257 = vld [vmem:[%s216 + $0xb0] sm:$0xff]
        %v258 = vld [vmem:[%s216 + $0xb8] sm:$0xff]
        %v259 = vld [vmem:[%s216 + $0xc0] sm:$0xf]
        %v260 = vld [vmem:[%s216 + $0xc4] sm:$0xff]
        %v261 = vld [vmem:[%s216 + $0xcc] sm:$0xff]
        %v262 = vld [vmem:[%s216 + $0xd4] sm:$0xff]
        %v263 = vld [vmem:[%s216 + $0xdc] sm:$0xf]
        %v264 = vld [vmem:[%s222] sm:$0xff]
        %v265 = vld [vmem:[%s222 + $0x8] sm:$0xff]
        %v266 = vld [vmem:[%s222 + $0x10] sm:$0xff]
        %v267 = vld [vmem:[%s222 + $0x18] sm:$0xff]
        %v268 = vld [vmem:[%s222 + $0x20] sm:$0xff]
        %v269 = vld [vmem:[%s222 + $0x28] sm:$0xff]
        %v270 = vld [vmem:[%s222 + $0x30] sm:$0xff]
        %v271 = vld [vmem:[%s222 + $0x38] sm:$0xff]
        %v272 = vld [vmem:[%s222 + $0x40] sm:$0xff]
        %v273 = vld [vmem:[%s222 + $0x48] sm:$0xff]
        %v274 = vld [vmem:[%s222 + $0x50] sm:$0xff]
        %v275 = vld [vmem:[%s222 + $0x58] sm:$0xff]
        %v276 = vld [vmem:[%s222 + $0x60] sm:$0xff]
        %v277 = vld [vmem:[%s222 + $0x68] sm:$0xff]
        %v278 = vld [vmem:[%s222 + $0x70] sm:$0xff]
        %v279 = vld [vmem:[%s222 + $0x78] sm:$0xff]
        %v280 = vld [vmem:[%s222 + $0x80] sm:$0xff]
        %v281 = vld [vmem:[%s222 + $0x88] sm:$0xff]
        %v282 = vld [vmem:[%s222 + $0x90] sm:$0xff]
        %v283 = vld [vmem:[%s222 + $0x98] sm:$0xff]
        %v284 = vld [vmem:[%s222 + $0xa0] sm:$0xff]
        %v285 = vld [vmem:[%s222 + $0xa8] sm:$0xff]
        %v286 = vld [vmem:[%s222 + $0xb0] sm:$0xff]
        %v287 = vld [vmem:[%s222 + $0xb8] sm:$0xff]
        %v288 = vld [vmem:[%s222 + $0xc0] sm:$0xff]
        %v289 = vld [vmem:[%s222 + $0xc8] sm:$0xff]
        %v290 = vld [vmem:[%s222 + $0xd0] sm:$0xff]
        %v291 = vld [vmem:[%s222 + $0xd8] sm:$0xff]
        %v292 = vld [vmem:[%s222 + $0xe0] sm:$0xff]
        %v293 = vld [vmem:[%s222 + $0xe8] sm:$0xff]
        %v294 = vld [vmem:[%s222 + $0xf0] sm:$0xff]
        %v295 = vld [vmem:[%s222 + $0xf8] sm:$0xff]
        %v296 = vld [vmem:[%s222 + $0x100] sm:$0xff]
        %v297 = vld [vmem:[%s222 + $0x108] sm:$0xff]
        %v298 = vld [vmem:[%s222 + $0x110] sm:$0xff]
        %v299 = vld [vmem:[%s222 + $0x118] sm:$0xff]
        %v300 = vld [vmem:[%s222 + $0x120] sm:$0xff]
        %v301 = vld [vmem:[%s222 + $0x128] sm:$0xff]
        %v302 = vld [vmem:[%s222 + $0x130] sm:$0xff]
        %v303 = vld [vmem:[%s222 + $0x138] sm:$0xff]
        %v304 = vld [vmem:[%s222 + $0x140] sm:$0xff]
        %v305 = vld [vmem:[%s222 + $0x148] sm:$0xff]
        %v306 = vld [vmem:[%s222 + $0x150] sm:$0xff]
        %v307 = vld [vmem:[%s222 + $0x158] sm:$0xff]
        %v308 = vld [vmem:[%s222 + $0x160] sm:$0xff]
        %v309 = vld [vmem:[%s222 + $0x168] sm:$0xff]
        %v310 = vld [vmem:[%s222 + $0x170] sm:$0xff]
        %v311 = vld [vmem:[%s222 + $0x178] sm:$0xff]
        %v312 = vld [vmem:[%s222 + $0x180] sm:$0xff]
        %v313 = vld [vmem:[%s222 + $0x188] sm:$0xff]
        %v314 = vld [vmem:[%s222 + $0x190] sm:$0xff]
        %v315 = vld [vmem:[%s222 + $0x198] sm:$0xff]
        %v316 = vld [vmem:[%s222 + $0x1a0] sm:$0xff]
        %v317 = vld [vmem:[%s222 + $0x1a8] sm:$0xff]
        %v318 = vld [vmem:[%s222 + $0x1b0] sm:$0xff]
        %v319 = vld [vmem:[%s222 + $0x1b8] sm:$0xff]
        %v320 = vld [vmem:[%s222 + $0x1c0] sm:$0xff]
        %v321 = vld [vmem:[%s222 + $0x1c8] sm:$0xff]
        %v322 = vld [vmem:[%s222 + $0x1d0] sm:$0xff]
        %v323 = vld [vmem:[%s222 + $0x1d8] sm:$0xff]
        %v324 = vld [vmem:[%s222 + $0x1e0] sm:$0xff]
        %v325 = vld [vmem:[%s222 + $0x1e8] sm:$0xff]
        %v326 = vld [vmem:[%s222 + $0x1f0] sm:$0xff]
        %v327 = vld [vmem:[%s222 + $0x1f8] sm:$0xff]
        %v328 = vld [vmem:[%s222 + $0x200] sm:$0xff]
        %v329 = vld [vmem:[%s222 + $0x208] sm:$0xff]
        %v330 = vld [vmem:[%s222 + $0x210] sm:$0xff]
        %v331 = vld [vmem:[%s222 + $0x218] sm:$0xff]
        %v332 = vld [vmem:[%s222 + $0x220] sm:$0xff]
        %v333 = vld [vmem:[%s222 + $0x228] sm:$0xff]
        %v334 = vld [vmem:[%s222 + $0x230] sm:$0xff]
        %v335 = vld [vmem:[%s222 + $0x238] sm:$0xff]
        %v336 = vld [vmem:[%s222 + $0x240] sm:$0xff]
        %v337 = vld [vmem:[%s222 + $0x248] sm:$0xff]
        %v338 = vld [vmem:[%s222 + $0x250] sm:$0xff]
        %v339 = vld [vmem:[%s222 + $0x258] sm:$0xff]
        %v340 = vld [vmem:[%s222 + $0x260] sm:$0xff]
        %v341 = vld [vmem:[%s222 + $0x268] sm:$0xff]
        %v342 = vld [vmem:[%s222 + $0x270] sm:$0xff]
        %v343 = vld [vmem:[%s222 + $0x278] sm:$0xff]
        %v344 = vld [vmem:[%s222 + $0x280] sm:$0xff]
        %v345 = vld [vmem:[%s222 + $0x288] sm:$0xff]
        %v346 = vld [vmem:[%s222 + $0x290] sm:$0xff]
        %v347 = vld [vmem:[%s222 + $0x298] sm:$0xff]
        %v348 = vld [vmem:[%s222 + $0x2a0] sm:$0xff]
        %v349 = vld [vmem:[%s222 + $0x2a8] sm:$0xff]
        %v350 = vld [vmem:[%s222 + $0x2b0] sm:$0xff]
        %v351 = vld [vmem:[%s222 + $0x2b8] sm:$0xff]
        %v352 = vld [vmem:[%s222 + $0x2c0] sm:$0xff]
        %v353 = vld [vmem:[%s222 + $0x2c8] sm:$0xff]
        %v354 = vld [vmem:[%s222 + $0x2d0] sm:$0xff]
        %v355 = vld [vmem:[%s222 + $0x2d8] sm:$0xff]
        %v356 = vld [vmem:[%s222 + $0x2e0] sm:$0xff]
        %v357 = vld [vmem:[%s222 + $0x2e8] sm:$0xff]
        %v358 = vld [vmem:[%s222 + $0x2f0] sm:$0xff]
        %v359 = vld [vmem:[%s222 + $0x2f8] sm:$0xff]
        %v360 = vld [vmem:[%s222 + $0x300] sm:$0xff]
        %v361 = vld [vmem:[%s222 + $0x308] sm:$0xff]
        %v362 = vld [vmem:[%s222 + $0x310] sm:$0xff]
        %v363 = vld [vmem:[%s222 + $0x318] sm:$0xff]
        %v364 = vld [vmem:[%s222 + $0x320] sm:$0xff]
        %v365 = vld [vmem:[%s222 + $0x328] sm:$0xff]
        %v366 = vld [vmem:[%s222 + $0x330] sm:$0xff]
        %v367 = vld [vmem:[%s222 + $0x338] sm:$0xff]
        %v368 = vld [vmem:[%s222 + $0x340] sm:$0xff]
        %v369 = vld [vmem:[%s222 + $0x348] sm:$0xff]
        %v370 = vld [vmem:[%s222 + $0x350] sm:$0xff]
        %v371 = vld [vmem:[%s222 + $0x358] sm:$0xff]
        %v372 = vld [vmem:[%s227] sm:$0x3]
        %v374 = vperm.slane %v372, 0
        %v375 = vperm.slane %v372, 1
        %v410 = vunpack.c.l.b16 %v232
        %v411 = vunpack.c.h.b16 %v232
        %v412 = vunpack.c.l.b16 %v233
        %v413 = vunpack.c.h.b16 %v233
        %v414 = vunpack.c.l.b16 %v234
        %v415 = vunpack.c.h.b16 %v234
        %v416 = vunpack.c.l.b16 %v235
        %v417 = vunpack.c.l.b16 %v236
        %v418 = vunpack.c.h.b16 %v236
        %v419 = vunpack.c.l.b16 %v237
        %v420 = vunpack.c.h.b16 %v237
        %v421 = vunpack.c.l.b16 %v238
        %v422 = vunpack.c.h.b16 %v238
        %v423 = vunpack.c.l.b16 %v239
        %v424 = vunpack.c.l.b16 %v240
        %v425 = vunpack.c.h.b16 %v240
        %v426 = vunpack.c.l.b16 %v241
        %v427 = vunpack.c.h.b16 %v241
        %v428 = vunpack.c.l.b16 %v242
        %v429 = vunpack.c.h.b16 %v242
        %v430 = vunpack.c.l.b16 %v243
        %v431 = vunpack.c.l.b16 %v244
        %v432 = vunpack.c.h.b16 %v244
        %v433 = vunpack.c.l.b16 %v245
        %v434 = vunpack.c.h.b16 %v245
        %v435 = vunpack.c.l.b16 %v246
        %v436 = vunpack.c.h.b16 %v246
        %v437 = vunpack.c.l.b16 %v247
        %v438 = vunpack.c.l.b16 %v248
        %v439 = vunpack.c.h.b16 %v248
        %v440 = vunpack.c.l.b16 %v249
        %v441 = vunpack.c.h.b16 %v249
        %v442 = vunpack.c.l.b16 %v250
        %v443 = vunpack.c.h.b16 %v250
        %v444 = vunpack.c.l.b16 %v251
        %v445 = vunpack.c.l.b16 %v252
        %v446 = vunpack.c.h.b16 %v252
        %v447 = vunpack.c.l.b16 %v253
        %v448 = vunpack.c.h.b16 %v253
        %v449 = vunpack.c.l.b16 %v254
        %v450 = vunpack.c.h.b16 %v254
        %v451 = vunpack.c.l.b16 %v255
        %v452 = vunpack.c.l.b16 %v256
        %v453 = vunpack.c.h.b16 %v256
        %v454 = vunpack.c.l.b16 %v257
        %v455 = vunpack.c.h.b16 %v257
        %v456 = vunpack.c.l.b16 %v258
        %v457 = vunpack.c.h.b16 %v258
        %v458 = vunpack.c.l.b16 %v259
        %v459 = vunpack.c.l.b16 %v260
        %v460 = vunpack.c.h.b16 %v260
        %v461 = vunpack.c.l.b16 %v261
        %v462 = vunpack.c.h.b16 %v261
        %v463 = vunpack.c.l.b16 %v262
        %v464 = vunpack.c.h.b16 %v262
        %v465 = vunpack.c.l.b16 %v263
        %v466 = vpack.c.b16 %v417, %v410
        %v467 = vpack.c.b16 %v418, %v411
        %v468 = vpack.c.b16 %v419, %v412
        %v469 = vpack.c.b16 %v420, %v413
        %v470 = vpack.c.b16 %v421, %v414
        %v471 = vpack.c.b16 %v422, %v415
        %v472 = vpack.c.b16 %v423, %v416
        %v473 = vpack.c.b16 %v431, %v424
        %v474 = vpack.c.b16 %v432, %v425
        %v475 = vpack.c.b16 %v433, %v426
        %v476 = vpack.c.b16 %v434, %v427
        %v477 = vpack.c.b16 %v435, %v428
        %v478 = vpack.c.b16 %v436, %v429
        %v479 = vpack.c.b16 %v437, %v430
        %v480 = vpack.c.b16 %v445, %v438
        %v481 = vpack.c.b16 %v446, %v439
        %v482 = vpack.c.b16 %v447, %v440
        %v483 = vpack.c.b16 %v448, %v441
        %v484 = vpack.c.b16 %v449, %v442
        %v485 = vpack.c.b16 %v450, %v443
        %v486 = vpack.c.b16 %v451, %v444
        %v487 = vpack.c.b16 %v459, %v452
        %v488 = vpack.c.b16 %v460, %v453
        %v489 = vpack.c.b16 %v461, %v454
        %v490 = vpack.c.b16 %v462, %v455
        %v491 = vpack.c.b16 %v463, %v456
        %v492 = vpack.c.b16 %v464, %v457
        %v493 = vpack.c.b16 %v465, %v458
        %v626 = vunpack.c.l.b16 %v264
        %v627 = vunpack.c.h.b16 %v264
        %v628 = vunpack.c.l.b16 %v265
        %v629 = vunpack.c.h.b16 %v265
        %v630 = vunpack.c.l.b16 %v266
        %v631 = vunpack.c.h.b16 %v266
        %v632 = vunpack.c.l.b16 %v267
        %v633 = vunpack.c.h.b16 %v267
        %v634 = vunpack.c.l.b16 %v268
        %v635 = vunpack.c.h.b16 %v268
        %v636 = vunpack.c.l.b16 %v269
        %v637 = vunpack.c.h.b16 %v269
        %v638 = vunpack.c.l.b16 %v270
        %v639 = vunpack.c.h.b16 %v270
        %v640 = vunpack.c.l.b16 %v271
        %v641 = vunpack.c.h.b16 %v271
        %v642 = vunpack.c.l.b16 %v272
        %v643 = vunpack.c.h.b16 %v272
        %v644 = vunpack.c.l.b16 %v273
        %v645 = vunpack.c.h.b16 %v273
        %v646 = vunpack.c.l.b16 %v274
        %v647 = vunpack.c.h.b16 %v274
        %v648 = vunpack.c.l.b16 %v275
        %v649 = vunpack.c.h.b16 %v275
        %v650 = vunpack.c.l.b16 %v276
        %v651 = vunpack.c.h.b16 %v276
        %v652 = vunpack.c.l.b16 %v277
        %v653 = vunpack.c.h.b16 %v277
        %v654 = vunpack.c.l.b16 %v278
        %v655 = vunpack.c.h.b16 %v278
        %v656 = vunpack.c.l.b16 %v279
        %v657 = vunpack.c.h.b16 %v279
        %v658 = vunpack.c.l.b16 %v280
        %v659 = vunpack.c.h.b16 %v280
        %v660 = vunpack.c.l.b16 %v281
        %v661 = vunpack.c.h.b16 %v281
        %v662 = vunpack.c.l.b16 %v282
        %v663 = vunpack.c.h.b16 %v282
        %v664 = vunpack.c.l.b16 %v283
        %v665 = vunpack.c.h.b16 %v283
        %v666 = vunpack.c.l.b16 %v284
        %v667 = vunpack.c.h.b16 %v284
        %v668 = vunpack.c.l.b16 %v285
        %v669 = vunpack.c.h.b16 %v285
        %v670 = vunpack.c.l.b16 %v286
        %v671 = vunpack.c.h.b16 %v286
        %v672 = vunpack.c.l.b16 %v287
        %v673 = vunpack.c.h.b16 %v287
        %v674 = vunpack.c.l.b16 %v288
        %v675 = vunpack.c.h.b16 %v288
        %v676 = vunpack.c.l.b16 %v289
        %v677 = vunpack.c.h.b16 %v289
        %v678 = vunpack.c.l.b16 %v290
        %v679 = vunpack.c.h.b16 %v290
        %v680 = vunpack.c.l.b16 %v291
        %v681 = vunpack.c.h.b16 %v291
        %v682 = vunpack.c.l.b16 %v292
        %v683 = vunpack.c.h.b16 %v292
        %v684 = vunpack.c.l.b16 %v293
        %v685 = vunpack.c.h.b16 %v293
        %v686 = vunpack.c.l.b16 %v294
        %v687 = vunpack.c.h.b16 %v294
        %v688 = vunpack.c.l.b16 %v295
        %v689 = vunpack.c.h.b16 %v295
        %v690 = vunpack.c.l.b16 %v296
        %v691 = vunpack.c.h.b16 %v296
        %v692 = vunpack.c.l.b16 %v297
        %v693 = vunpack.c.h.b16 %v297
        %v694 = vunpack.c.l.b16 %v298
        %v695 = vunpack.c.h.b16 %v298
        %v696 = vunpack.c.l.b16 %v299
        %v697 = vunpack.c.h.b16 %v299
        %v698 = vunpack.c.l.b16 %v300
        %v699 = vunpack.c.h.b16 %v300
        %v700 = vunpack.c.l.b16 %v301
        %v701 = vunpack.c.h.b16 %v301
        %v702 = vunpack.c.l.b16 %v302
        %v703 = vunpack.c.h.b16 %v302
        %v704 = vunpack.c.l.b16 %v303
        %v705 = vunpack.c.h.b16 %v303
        %v706 = vunpack.c.l.b16 %v304
        %v707 = vunpack.c.h.b16 %v304
        %v708 = vunpack.c.l.b16 %v305
        %v709 = vunpack.c.h.b16 %v305
        %v710 = vunpack.c.l.b16 %v306
        %v711 = vunpack.c.h.b16 %v306
        %v712 = vunpack.c.l.b16 %v307
        %v713 = vunpack.c.h.b16 %v307
        %v714 = vunpack.c.l.b16 %v308
        %v715 = vunpack.c.h.b16 %v308
        %v716 = vunpack.c.l.b16 %v309
        %v717 = vunpack.c.h.b16 %v309
        %v718 = vunpack.c.l.b16 %v310
        %v719 = vunpack.c.h.b16 %v310
        %v720 = vunpack.c.l.b16 %v311
        %v721 = vunpack.c.h.b16 %v311
        %v722 = vunpack.c.l.b16 %v312
        %v723 = vunpack.c.h.b16 %v312
        %v724 = vunpack.c.l.b16 %v313
        %v725 = vunpack.c.h.b16 %v313
        %v726 = vunpack.c.l.b16 %v314
        %v727 = vunpack.c.h.b16 %v314
        %v728 = vunpack.c.l.b16 %v315
        %v729 = vunpack.c.h.b16 %v315
        %v730 = vunpack.c.l.b16 %v316
        %v731 = vunpack.c.h.b16 %v316
        %v732 = vunpack.c.l.b16 %v317
        %v733 = vunpack.c.h.b16 %v317
        %v734 = vunpack.c.l.b16 %v318
        %v735 = vunpack.c.h.b16 %v318
        %v736 = vunpack.c.l.b16 %v319
        %v737 = vunpack.c.h.b16 %v319
        %v738 = vunpack.c.l.b16 %v320
        %v739 = vunpack.c.h.b16 %v320
        %v740 = vunpack.c.l.b16 %v321
        %v741 = vunpack.c.h.b16 %v321
        %v742 = vunpack.c.l.b16 %v322
        %v743 = vunpack.c.h.b16 %v322
        %v744 = vunpack.c.l.b16 %v323
        %v745 = vunpack.c.h.b16 %v323
        %v746 = vunpack.c.l.b16 %v324
        %v747 = vunpack.c.h.b16 %v324
        %v748 = vunpack.c.l.b16 %v325
        %v749 = vunpack.c.h.b16 %v325
        %v750 = vunpack.c.l.b16 %v326
        %v751 = vunpack.c.h.b16 %v326
        %v752 = vunpack.c.l.b16 %v327
        %v753 = vunpack.c.h.b16 %v327
        %v754 = vunpack.c.l.b16 %v328
        %v755 = vunpack.c.h.b16 %v328
        %v756 = vunpack.c.l.b16 %v329
        %v757 = vunpack.c.h.b16 %v329
        %v758 = vunpack.c.l.b16 %v330
        %v759 = vunpack.c.h.b16 %v330
        %v760 = vunpack.c.l.b16 %v331
        %v761 = vunpack.c.h.b16 %v331
        %v762 = vunpack.c.l.b16 %v332
        %v763 = vunpack.c.h.b16 %v332
        %v764 = vunpack.c.l.b16 %v333
        %v765 = vunpack.c.h.b16 %v333
        %v766 = vunpack.c.l.b16 %v334
        %v767 = vunpack.c.h.b16 %v334
        %v768 = vunpack.c.l.b16 %v335
        %v769 = vunpack.c.h.b16 %v335
        %v770 = vunpack.c.l.b16 %v336
        %v771 = vunpack.c.h.b16 %v336
        %v772 = vunpack.c.l.b16 %v337
        %v773 = vunpack.c.h.b16 %v337
        %v774 = vunpack.c.l.b16 %v338
        %v775 = vunpack.c.h.b16 %v338
        %v776 = vunpack.c.l.b16 %v339
        %v777 = vunpack.c.h.b16 %v339
        %v778 = vunpack.c.l.b16 %v340
        %v779 = vunpack.c.h.b16 %v340
        %v780 = vunpack.c.l.b16 %v341
        %v781 = vunpack.c.h.b16 %v341
        %v782 = vunpack.c.l.b16 %v342
        %v783 = vunpack.c.h.b16 %v342
        %v784 = vunpack.c.l.b16 %v343
        %v785 = vunpack.c.h.b16 %v343
        %v786 = vunpack.c.l.b16 %v344
        %v787 = vunpack.c.h.b16 %v344
        %v788 = vunpack.c.l.b16 %v345
        %v789 = vunpack.c.h.b16 %v345
        %v790 = vunpack.c.l.b16 %v346
        %v791 = vunpack.c.h.b16 %v346
        %v792 = vunpack.c.l.b16 %v347
        %v793 = vunpack.c.h.b16 %v347
        %v794 = vunpack.c.l.b16 %v348
        %v795 = vunpack.c.h.b16 %v348
        %v796 = vunpack.c.l.b16 %v349
        %v797 = vunpack.c.h.b16 %v349
        %v798 = vunpack.c.l.b16 %v350
        %v799 = vunpack.c.h.b16 %v350
        %v800 = vunpack.c.l.b16 %v351
        %v801 = vunpack.c.h.b16 %v351
        %v802 = vunpack.c.l.b16 %v352
        %v803 = vunpack.c.h.b16 %v352
        %v804 = vunpack.c.l.b16 %v353
        %v805 = vunpack.c.h.b16 %v353
        %v806 = vunpack.c.l.b16 %v354
        %v807 = vunpack.c.h.b16 %v354
        %v808 = vunpack.c.l.b16 %v355
        %v809 = vunpack.c.h.b16 %v355
        %v810 = vunpack.c.l.b16 %v356
        %v811 = vunpack.c.h.b16 %v356
        %v812 = vunpack.c.l.b16 %v357
        %v813 = vunpack.c.h.b16 %v357
        %v814 = vunpack.c.l.b16 %v358
        %v815 = vunpack.c.h.b16 %v358
        %v816 = vunpack.c.l.b16 %v359
        %v817 = vunpack.c.h.b16 %v359
        %v818 = vunpack.c.l.b16 %v360
        %v819 = vunpack.c.h.b16 %v360
        %v820 = vunpack.c.l.b16 %v361
        %v821 = vunpack.c.h.b16 %v361
        %v822 = vunpack.c.l.b16 %v362
        %v823 = vunpack.c.h.b16 %v362
        %v824 = vunpack.c.l.b16 %v363
        %v825 = vunpack.c.h.b16 %v363
        %v826 = vunpack.c.l.b16 %v364
        %v827 = vunpack.c.h.b16 %v364
        %v828 = vunpack.c.l.b16 %v365
        %v829 = vunpack.c.h.b16 %v365
        %v830 = vunpack.c.l.b16 %v366
        %v831 = vunpack.c.h.b16 %v366
        %v832 = vunpack.c.l.b16 %v367
        %v833 = vunpack.c.h.b16 %v367
        %v834 = vunpack.c.l.b16 %v368
        %v835 = vunpack.c.h.b16 %v368
        %v836 = vunpack.c.l.b16 %v369
        %v837 = vunpack.c.h.b16 %v369
        %v838 = vunpack.c.l.b16 %v370
        %v839 = vunpack.c.h.b16 %v370
        %v840 = vunpack.c.l.b16 %v371
        %v841 = vunpack.c.h.b16 %v371
        %v842 = vpack.c.b16 %v628, %v626
        %v843 = vpack.c.b16 %v629, %v627
        %v844 = vpack.c.b16 %v632, %v630
        %v845 = vpack.c.b16 %v633, %v631
        %v846 = vpack.c.b16 %v636, %v634
        %v847 = vpack.c.b16 %v637, %v635
        %v848 = vpack.c.b16 %v640, %v638
        %v849 = vpack.c.b16 %v641, %v639
        %v850 = vpack.c.b16 %v644, %v642
        %v851 = vpack.c.b16 %v645, %v643
        %v852 = vpack.c.b16 %v648, %v646
        %v853 = vpack.c.b16 %v649, %v647
        %v854 = vpack.c.b16 %v652, %v650
        %v855 = vpack.c.b16 %v653, %v651
        %v856 = vpack.c.b16 %v656, %v654
        %v857 = vpack.c.b16 %v657, %v655
        %v858 = vpack.c.b16 %v660, %v658
        %v859 = vpack.c.b16 %v661, %v659
        %v860 = vpack.c.b16 %v664, %v662
        %v861 = vpack.c.b16 %v665, %v663
        %v862 = vpack.c.b16 %v668, %v666
        %v863 = vpack.c.b16 %v669, %v667
        %v864 = vpack.c.b16 %v672, %v670
        %v865 = vpack.c.b16 %v673, %v671
        %v866 = vpack.c.b16 %v676, %v674
        %v867 = vpack.c.b16 %v677, %v675
        %v868 = vpack.c.b16 %v680, %v678
        %v869 = vpack.c.b16 %v681, %v679
        %v870 = vpack.c.b16 %v684, %v682
        %v871 = vpack.c.b16 %v685, %v683
        %v872 = vpack.c.b16 %v688, %v686
        %v873 = vpack.c.b16 %v689, %v687
        %v874 = vpack.c.b16 %v692, %v690
        %v875 = vpack.c.b16 %v693, %v691
        %v876 = vpack.c.b16 %v696, %v694
        %v877 = vpack.c.b16 %v697, %v695
        %v878 = vpack.c.b16 %v700, %v698
        %v879 = vpack.c.b16 %v701, %v699
        %v880 = vpack.c.b16 %v704, %v702
        %v881 = vpack.c.b16 %v705, %v703
        %v882 = vpack.c.b16 %v708, %v706
        %v883 = vpack.c.b16 %v709, %v707
        %v884 = vpack.c.b16 %v712, %v710
        %v885 = vpack.c.b16 %v713, %v711
        %v886 = vpack.c.b16 %v716, %v714
        %v887 = vpack.c.b16 %v717, %v715
        %v888 = vpack.c.b16 %v720, %v718
        %v889 = vpack.c.b16 %v721, %v719
        %v890 = vpack.c.b16 %v724, %v722
        %v891 = vpack.c.b16 %v725, %v723
        %v892 = vpack.c.b16 %v728, %v726
        %v893 = vpack.c.b16 %v729, %v727
        %v894 = vpack.c.b16 %v732, %v730
        %v895 = vpack.c.b16 %v733, %v731
        %v896 = vpack.c.b16 %v736, %v734
        %v897 = vpack.c.b16 %v737, %v735
        %v898 = vpack.c.b16 %v740, %v738
        %v899 = vpack.c.b16 %v741, %v739
        %v900 = vpack.c.b16 %v744, %v742
        %v901 = vpack.c.b16 %v745, %v743
        %v902 = vpack.c.b16 %v748, %v746
        %v903 = vpack.c.b16 %v749, %v747
        %v904 = vpack.c.b16 %v752, %v750
        %v905 = vpack.c.b16 %v753, %v751
        %v906 = vpack.c.b16 %v756, %v754
        %v907 = vpack.c.b16 %v757, %v755
        %v908 = vpack.c.b16 %v760, %v758
        %v909 = vpack.c.b16 %v761, %v759
        %v910 = vpack.c.b16 %v764, %v762
        %v911 = vpack.c.b16 %v765, %v763
        %v912 = vpack.c.b16 %v768, %v766
        %v913 = vpack.c.b16 %v769, %v767
        %v914 = vpack.c.b16 %v772, %v770
        %v915 = vpack.c.b16 %v773, %v771
        %v916 = vpack.c.b16 %v776, %v774
        %v917 = vpack.c.b16 %v777, %v775
        %v918 = vpack.c.b16 %v780, %v778
        %v919 = vpack.c.b16 %v781, %v779
        %v920 = vpack.c.b16 %v784, %v782
        %v921 = vpack.c.b16 %v785, %v783
        %v922 = vpack.c.b16 %v788, %v786
        %v923 = vpack.c.b16 %v789, %v787
        %v924 = vpack.c.b16 %v792, %v790
        %v925 = vpack.c.b16 %v793, %v791
        %v926 = vpack.c.b16 %v796, %v794
        %v927 = vpack.c.b16 %v797, %v795
        %v928 = vpack.c.b16 %v800, %v798
        %v929 = vpack.c.b16 %v801, %v799
        %v930 = vpack.c.b16 %v804, %v802
        %v931 = vpack.c.b16 %v805, %v803
        %v932 = vpack.c.b16 %v808, %v806
        %v933 = vpack.c.b16 %v809, %v807
        %v934 = vpack.c.b16 %v812, %v810
        %v935 = vpack.c.b16 %v813, %v811
        %v936 = vpack.c.b16 %v816, %v814
        %v937 = vpack.c.b16 %v817, %v815
        %v938 = vpack.c.b16 %v820, %v818
        %v939 = vpack.c.b16 %v821, %v819
        %v940 = vpack.c.b16 %v824, %v822
        %v941 = vpack.c.b16 %v825, %v823
        %v942 = vpack.c.b16 %v828, %v826
        %v943 = vpack.c.b16 %v829, %v827
        %v944 = vpack.c.b16 %v832, %v830
        %v945 = vpack.c.b16 %v833, %v831
        %v946 = vpack.c.b16 %v836, %v834
        %v947 = vpack.c.b16 %v837, %v835
        %v948 = vpack.c.b16 %v840, %v838
        %v949 = vpack.c.b16 %v841, %v839
        %vm1058 = vcmask 785408
        %v1060 = vsel %vm1058, %v472, 0
        %v1063 = vsel %vm1058, %v479, 0
        %v1066 = vsel %vm1058, %v486, 0
        %v1069 = vsel %vm1058, %v493, 0
        %1071 = vmatpush.bf16.msra.mxu0 %v856
        %1072 = vmatpush.bf16.msra.mxu0 %v854
        %1073 = vmatpush.bf16.msra.mxu0 %v852
        %1074 = vmatpush.bf16.msra.mxu0 %v850
        %1075 = vmatpush.bf16.msra.mxu0 %v848
        %1076 = vmatpush.bf16.msra.mxu0 %v846
        %1077 = vmatpush.bf16.msra.mxu0 %v844
        %1078 = vmatpush.bf16.msra.mxu0 %v842
        %1079 = vmatmul.bf16.gmra.mxu0 %v466
        %v1080 = vpop.f32.mrf.mxu0
        %v1081 = vadd.f32 %v374, %v1080
        %v1082 = vpop.f32.mrf.mxu0
        %v1083 = vadd.f32 %v374, %v1082
        %1084 = vmatmul.bf16.gmra.mxu0 %v473
        %v1085 = vpop.f32.mrf.mxu0
        %v1086 = vadd.f32 %v374, %v1085
        %v1087 = vpop.f32.mrf.mxu0
        %v1088 = vadd.f32 %v374, %v1087
        %1089 = vmatmul.bf16.gmra.mxu0 %v480
        %v1090 = vpop.f32.mrf.mxu0
        %v1091 = vadd.f32 %v374, %v1090
        %v1092 = vpop.f32.mrf.mxu0
        %v1093 = vadd.f32 %v374, %v1092
        %1094 = vmatmul.bf16.gmra.mxu0 %v487
        %v1095 = vpop.f32.mrf.mxu0
        %v1096 = vadd.f32 %v374, %v1095
        %v1097 = vpop.f32.mrf.mxu0
        %v1098 = vadd.f32 %v374, %v1097
        %1099 = vdwg.mxu0
        %1100 = vmatpush.bf16.msra.mxu0 %v872
        %1101 = vmatpush.bf16.msra.mxu0 %v870
        %1102 = vmatpush.bf16.msra.mxu0 %v868
        %1103 = vmatpush.bf16.msra.mxu0 %v866
        %1104 = vmatpush.bf16.msra.mxu0 %v864
        %1105 = vmatpush.bf16.msra.mxu0 %v862
        %1106 = vmatpush.bf16.msra.mxu0 %v860
        %1107 = vmatpush.bf16.msra.mxu0 %v858
        %1108 = vmatmul.bf16.gmra.mxu0 %v467
        %v1109 = vpop.f32.mrf.mxu0
        %v1110 = vadd.f32 %v1081, %v1109
        %v1111 = vpop.f32.mrf.mxu0
        %v1112 = vadd.f32 %v1083, %v1111
        %1113 = vmatmul.bf16.gmra.mxu0 %v474
        %v1114 = vpop.f32.mrf.mxu0
        %v1115 = vadd.f32 %v1086, %v1114
        %v1116 = vpop.f32.mrf.mxu0
        %v1117 = vadd.f32 %v1088, %v1116
        %1118 = vmatmul.bf16.gmra.mxu0 %v481
        %v1119 = vpop.f32.mrf.mxu0
        %v1120 = vadd.f32 %v1091, %v1119
        %v1121 = vpop.f32.mrf.mxu0
        %v1122 = vadd.f32 %v1093, %v1121
        %1123 = vmatmul.bf16.gmra.mxu0 %v488
        %v1124 = vpop.f32.mrf.mxu0
        %v1125 = vadd.f32 %v1096, %v1124
        %v1126 = vpop.f32.mrf.mxu0
        %v1127 = vadd.f32 %v1098, %v1126
        %1128 = vdwg.mxu0
        %1129 = vmatpush.bf16.msra.mxu0 %v888
        %1130 = vmatpush.bf16.msra.mxu0 %v886
        %1131 = vmatpush.bf16.msra.mxu0 %v884
        %1132 = vmatpush.bf16.msra.mxu0 %v882
        %1133 = vmatpush.bf16.msra.mxu0 %v880
        %1134 = vmatpush.bf16.msra.mxu0 %v878
        %1135 = vmatpush.bf16.msra.mxu0 %v876
        %1136 = vmatpush.bf16.msra.mxu0 %v874
        %1137 = vmatmul.bf16.gmra.mxu0 %v468
        %v1138 = vpop.f32.mrf.mxu0
        %v1139 = vadd.f32 %v1110, %v1138
        %v1140 = vpop.f32.mrf.mxu0
        %v1141 = vadd.f32 %v1112, %v1140
        %1142 = vmatmul.bf16.gmra.mxu0 %v475
        %v1143 = vpop.f32.mrf.mxu0
        %v1144 = vadd.f32 %v1115, %v1143
        %v1145 = vpop.f32.mrf.mxu0
        %v1146 = vadd.f32 %v1117, %v1145
        %1147 = vmatmul.bf16.gmra.mxu0 %v482
        %v1148 = vpop.f32.mrf.mxu0
        %v1149 = vadd.f32 %v1120, %v1148
        %v1150 = vpop.f32.mrf.mxu0
        %v1151 = vadd.f32 %v1122, %v1150
        %1152 = vmatmul.bf16.gmra.mxu0 %v489
        %v1153 = vpop.f32.mrf.mxu0
        %v1154 = vadd.f32 %v1125, %v1153
        %v1155 = vpop.f32.mrf.mxu0
        %v1156 = vadd.f32 %v1127, %v1155
        %1157 = vdwg.mxu0
        %1158 = vmatpush.bf16.msra.mxu0 %v904
        %1159 = vmatpush.bf16.msra.mxu0 %v902
        %1160 = vmatpush.bf16.msra.mxu0 %v900
        %1161 = vmatpush.bf16.msra.mxu0 %v898
        %1162 = vmatpush.bf16.msra.mxu0 %v896
        %1163 = vmatpush.bf16.msra.mxu0 %v894
        %1164 = vmatpush.bf16.msra.mxu0 %v892
        %1165 = vmatpush.bf16.msra.mxu0 %v890
        %1166 = vmatmul.bf16.gmra.mxu0 %v469
        %v1167 = vpop.f32.mrf.mxu0
        %v1168 = vadd.f32 %v1139, %v1167
        %v1169 = vpop.f32.mrf.mxu0
        %v1170 = vadd.f32 %v1141, %v1169
        %1171 = vmatmul.bf16.gmra.mxu0 %v476
        %v1172 = vpop.f32.mrf.mxu0
        %v1173 = vadd.f32 %v1144, %v1172
        %v1174 = vpop.f32.mrf.mxu0
        %v1175 = vadd.f32 %v1146, %v1174
        %1176 = vmatmul.bf16.gmra.mxu0 %v483
        %v1177 = vpop.f32.mrf.mxu0
        %v1178 = vadd.f32 %v1149, %v1177
        %v1179 = vpop.f32.mrf.mxu0
        %v1180 = vadd.f32 %v1151, %v1179
        %1181 = vmatmul.bf16.gmra.mxu0 %v490
        %v1182 = vpop.f32.mrf.mxu0
        %v1183 = vadd.f32 %v1154, %v1182
        %v1184 = vpop.f32.mrf.mxu0
        %v1185 = vadd.f32 %v1156, %v1184
        %1186 = vdwg.mxu0
        %1187 = vmatpush.bf16.msra.mxu0 %v920
        %1188 = vmatpush.bf16.msra.mxu0 %v918
        %1189 = vmatpush.bf16.msra.mxu0 %v916
        %1190 = vmatpush.bf16.msra.mxu0 %v914
        %1191 = vmatpush.bf16.msra.mxu0 %v912
        %1192 = vmatpush.bf16.msra.mxu0 %v910
        %1193 = vmatpush.bf16.msra.mxu0 %v908
        %1194 = vmatpush.bf16.msra.mxu0 %v906
        %1195 = vmatmul.bf16.gmra.mxu0 %v470
        %v1196 = vpop.f32.mrf.mxu0
        %v1197 = vadd.f32 %v1168, %v1196
        %v1198 = vpop.f32.mrf.mxu0
        %v1199 = vadd.f32 %v1170, %v1198
        %1200 = vmatmul.bf16.gmra.mxu0 %v477
        %v1201 = vpop.f32.mrf.mxu0
        %v1202 = vadd.f32 %v1173, %v1201
        %v1203 = vpop.f32.mrf.mxu0
        %v1204 = vadd.f32 %v1175, %v1203
        %1205 = vmatmul.bf16.gmra.mxu0 %v484
        %v1206 = vpop.f32.mrf.mxu0
        %v1207 = vadd.f32 %v1178, %v1206
        %v1208 = vpop.f32.mrf.mxu0
        %v1209 = vadd.f32 %v1180, %v1208
        %1210 = vmatmul.bf16.gmra.mxu0 %v491
        %v1211 = vpop.f32.mrf.mxu0
        %v1212 = vadd.f32 %v1183, %v1211
        %v1213 = vpop.f32.mrf.mxu0
        %v1214 = vadd.f32 %v1185, %v1213
        %1215 = vdwg.mxu0
        %1216 = vmatpush.bf16.msra.mxu0 %v936
        %1217 = vmatpush.bf16.msra.mxu0 %v934
        %1218 = vmatpush.bf16.msra.mxu0 %v932
        %1219 = vmatpush.bf16.msra.mxu0 %v930
        %1220 = vmatpush.bf16.msra.mxu0 %v928
        %1221 = vmatpush.bf16.msra.mxu0 %v926
        %1222 = vmatpush.bf16.msra.mxu0 %v924
        %1223 = vmatpush.bf16.msra.mxu0 %v922
        %1224 = vmatmul.bf16.gmra.mxu0 %v471
        %v1225 = vpop.f32.mrf.mxu0
        %v1226 = vadd.f32 %v1197, %v1225
        %v1227 = vpop.f32.mrf.mxu0
        %v1228 = vadd.f32 %v1199, %v1227
        %1229 = vmatmul.bf16.gmra.mxu0 %v478
        %v1230 = vpop.f32.mrf.mxu0
        %v1231 = vadd.f32 %v1202, %v1230
        %v1232 = vpop.f32.mrf.mxu0
        %v1233 = vadd.f32 %v1204, %v1232
        %1234 = vmatmul.bf16.gmra.mxu0 %v485
        %v1235 = vpop.f32.mrf.mxu0
        %v1236 = vadd.f32 %v1207, %v1235
        %v1237 = vpop.f32.mrf.mxu0
        %v1238 = vadd.f32 %v1209, %v1237
        %1239 = vmatmul.bf16.gmra.mxu0 %v492
        %v1240 = vpop.f32.mrf.mxu0
        %v1241 = vadd.f32 %v1212, %v1240
        %v1242 = vpop.f32.mrf.mxu0
        %v1243 = vadd.f32 %v1214, %v1242
        %1244 = vdwg.mxu0
        %1245 = vmatpush.bf16.msra.mxu0 0
        %1246 = vmatpush.bf16.msra.mxu0 0
        %1247 = vmatpush.bf16.msra.mxu0 %v948
        %1248 = vmatpush.bf16.msra.mxu0 %v946
        %1249 = vmatpush.bf16.msra.mxu0 %v944
        %1250 = vmatpush.bf16.msra.mxu0 %v942
        %1251 = vmatpush.bf16.msra.mxu0 %v940
        %1252 = vmatpush.bf16.msra.mxu0 %v938
        %1253 = vmatmul.bf16.gmra.mxu0 %v1060
        %v1254 = vpop.f32.mrf.mxu0
        %v1255 = vadd.f32 %v1226, %v1254
        %v1256 = vpop.f32.mrf.mxu0
        %v1257 = vadd.f32 %v1228, %v1256
        %1258 = vmatmul.bf16.gmra.mxu0 %v1063
        %v1259 = vpop.f32.mrf.mxu0
        %v1260 = vadd.f32 %v1231, %v1259
        %v1261 = vpop.f32.mrf.mxu0
        %v1262 = vadd.f32 %v1233, %v1261
        %1263 = vmatmul.bf16.gmra.mxu0 %v1066
        %v1264 = vpop.f32.mrf.mxu0
        %v1265 = vadd.f32 %v1236, %v1264
        %v1266 = vpop.f32.mrf.mxu0
        %v1267 = vadd.f32 %v1238, %v1266
        %1268 = vmatmul.bf16.gmra.mxu0 %v1069
        %v1269 = vpop.f32.mrf.mxu0
        %v1270 = vadd.f32 %v1241, %v1269
        %v1271 = vpop.f32.mrf.mxu0
        %v1272 = vadd.f32 %v1243, %v1271
        %1273 = vdwg.mxu0
        %1274 = vmatpush.bf16.msra.mxu0 %v857
        %1275 = vmatpush.bf16.msra.mxu0 %v855
        %1276 = vmatpush.bf16.msra.mxu0 %v853
        %1277 = vmatpush.bf16.msra.mxu0 %v851
        %1278 = vmatpush.bf16.msra.mxu0 %v849
        %1279 = vmatpush.bf16.msra.mxu0 %v847
        %1280 = vmatpush.bf16.msra.mxu0 %v845
        %1281 = vmatpush.bf16.msra.mxu0 %v843
        %1282 = vmatmul.bf16.gmra.mxu0 %v466
        %v1283 = vpop.f32.mrf.mxu0
        %v1284 = vadd.f32 %v375, %v1283
        %v1285 = vpop.f32.mrf.mxu0
        %v1286 = vadd.f32 %v375, %v1285
        %1287 = vmatmul.bf16.gmra.mxu0 %v473
        %v1288 = vpop.f32.mrf.mxu0
        %v1289 = vadd.f32 %v375, %v1288
        %v1290 = vpop.f32.mrf.mxu0
        %v1291 = vadd.f32 %v375, %v1290
        %1292 = vmatmul.bf16.gmra.mxu0 %v480
        %v1293 = vpop.f32.mrf.mxu0
        %v1294 = vadd.f32 %v375, %v1293
        %v1295 = vpop.f32.mrf.mxu0
        %v1296 = vadd.f32 %v375, %v1295
        %1297 = vmatmul.bf16.gmra.mxu0 %v487
        %v1298 = vpop.f32.mrf.mxu0
        %v1299 = vadd.f32 %v375, %v1298
        %v1300 = vpop.f32.mrf.mxu0
        %v1301 = vadd.f32 %v375, %v1300
        %1302 = vdwg.mxu0
        %1303 = vmatpush.bf16.msra.mxu0 %v873
        %1304 = vmatpush.bf16.msra.mxu0 %v871
        %1305 = vmatpush.bf16.msra.mxu0 %v869
        %1306 = vmatpush.bf16.msra.mxu0 %v867
        %1307 = vmatpush.bf16.msra.mxu0 %v865
        %1308 = vmatpush.bf16.msra.mxu0 %v863
        %1309 = vmatpush.bf16.msra.mxu0 %v861
        %1310 = vmatpush.bf16.msra.mxu0 %v859
        %1311 = vmatmul.bf16.gmra.mxu0 %v467
        %v1312 = vpop.f32.mrf.mxu0
        %v1313 = vadd.f32 %v1284, %v1312
        %v1314 = vpop.f32.mrf.mxu0
        %v1315 = vadd.f32 %v1286, %v1314
        %1316 = vmatmul.bf16.gmra.mxu0 %v474
        %v1317 = vpop.f32.mrf.mxu0
        %v1318 = vadd.f32 %v1289, %v1317
        %v1319 = vpop.f32.mrf.mxu0
        %v1320 = vadd.f32 %v1291, %v1319
        %1321 = vmatmul.bf16.gmra.mxu0 %v481
        %v1322 = vpop.f32.mrf.mxu0
        %v1323 = vadd.f32 %v1294, %v1322
        %v1324 = vpop.f32.mrf.mxu0
        %v1325 = vadd.f32 %v1296, %v1324
        %1326 = vmatmul.bf16.gmra.mxu0 %v488
        %v1327 = vpop.f32.mrf.mxu0
        %v1328 = vadd.f32 %v1299, %v1327
        %v1329 = vpop.f32.mrf.mxu0
        %v1330 = vadd.f32 %v1301, %v1329
        %1331 = vdwg.mxu0
        %1332 = vmatpush.bf16.msra.mxu0 %v889
        %1333 = vmatpush.bf16.msra.mxu0 %v887
        %1334 = vmatpush.bf16.msra.mxu0 %v885
        %1335 = vmatpush.bf16.msra.mxu0 %v883
        %1336 = vmatpush.bf16.msra.mxu0 %v881
        %1337 = vmatpush.bf16.msra.mxu0 %v879
        %1338 = vmatpush.bf16.msra.mxu0 %v877
        %1339 = vmatpush.bf16.msra.mxu0 %v875
        %1340 = vmatmul.bf16.gmra.mxu0 %v468
        %v1341 = vpop.f32.mrf.mxu0
        %v1342 = vadd.f32 %v1313, %v1341
        %v1343 = vpop.f32.mrf.mxu0
        %v1344 = vadd.f32 %v1315, %v1343
        %1345 = vmatmul.bf16.gmra.mxu0 %v475
        %v1346 = vpop.f32.mrf.mxu0
        %v1347 = vadd.f32 %v1318, %v1346
        %v1348 = vpop.f32.mrf.mxu0
        %v1349 = vadd.f32 %v1320, %v1348
        %1350 = vmatmul.bf16.gmra.mxu0 %v482
        %v1351 = vpop.f32.mrf.mxu0
        %v1352 = vadd.f32 %v1323, %v1351
        %v1353 = vpop.f32.mrf.mxu0
        %v1354 = vadd.f32 %v1325, %v1353
        %1355 = vmatmul.bf16.gmra.mxu0 %v489
        %v1356 = vpop.f32.mrf.mxu0
        %v1357 = vadd.f32 %v1328, %v1356
        %v1358 = vpop.f32.mrf.mxu0
        %v1359 = vadd.f32 %v1330, %v1358
        %1360 = vdwg.mxu0
        %1361 = vmatpush.bf16.msra.mxu0 %v905
        %1362 = vmatpush.bf16.msra.mxu0 %v903
        %1363 = vmatpush.bf16.msra.mxu0 %v901
        %1364 = vmatpush.bf16.msra.mxu0 %v899
        %1365 = vmatpush.bf16.msra.mxu0 %v897
        %1366 = vmatpush.bf16.msra.mxu0 %v895
        %1367 = vmatpush.bf16.msra.mxu0 %v893
        %1368 = vmatpush.bf16.msra.mxu0 %v891
        %1369 = vmatmul.bf16.gmra.mxu0 %v469
        %v1370 = vpop.f32.mrf.mxu0
        %v1371 = vadd.f32 %v1342, %v1370
        %v1372 = vpop.f32.mrf.mxu0
        %v1373 = vadd.f32 %v1344, %v1372
        %1374 = vmatmul.bf16.gmra.mxu0 %v476
        %v1375 = vpop.f32.mrf.mxu0
        %v1376 = vadd.f32 %v1347, %v1375
        %v1377 = vpop.f32.mrf.mxu0
        %v1378 = vadd.f32 %v1349, %v1377
        %1379 = vmatmul.bf16.gmra.mxu0 %v483
        %v1380 = vpop.f32.mrf.mxu0
        %v1381 = vadd.f32 %v1352, %v1380
        %v1382 = vpop.f32.mrf.mxu0
        %v1383 = vadd.f32 %v1354, %v1382
        %1384 = vmatmul.bf16.gmra.mxu0 %v490
        %v1385 = vpop.f32.mrf.mxu0
        %v1386 = vadd.f32 %v1357, %v1385
        %v1387 = vpop.f32.mrf.mxu0
        %v1388 = vadd.f32 %v1359, %v1387
        %1389 = vdwg.mxu0
        %1390 = vmatpush.bf16.msra.mxu0 %v921
        %1391 = vmatpush.bf16.msra.mxu0 %v919
        %1392 = vmatpush.bf16.msra.mxu0 %v917
        %1393 = vmatpush.bf16.msra.mxu0 %v915
        %1394 = vmatpush.bf16.msra.mxu0 %v913
        %1395 = vmatpush.bf16.msra.mxu0 %v911
        %1396 = vmatpush.bf16.msra.mxu0 %v909
        %1397 = vmatpush.bf16.msra.mxu0 %v907
        %1398 = vmatmul.bf16.gmra.mxu0 %v470
        %v1399 = vpop.f32.mrf.mxu0
        %v1400 = vadd.f32 %v1371, %v1399
        %v1401 = vpop.f32.mrf.mxu0
        %v1402 = vadd.f32 %v1373, %v1401
        %1403 = vmatmul.bf16.gmra.mxu0 %v477
        %v1404 = vpop.f32.mrf.mxu0
        %v1405 = vadd.f32 %v1376, %v1404
        %v1406 = vpop.f32.mrf.mxu0
        %v1407 = vadd.f32 %v1378, %v1406
        %1408 = vmatmul.bf16.gmra.mxu0 %v484
        %v1409 = vpop.f32.mrf.mxu0
        %v1410 = vadd.f32 %v1381, %v1409
        %v1411 = vpop.f32.mrf.mxu0
        %v1412 = vadd.f32 %v1383, %v1411
        %1413 = vmatmul.bf16.gmra.mxu0 %v491
        %v1414 = vpop.f32.mrf.mxu0
        %v1415 = vadd.f32 %v1386, %v1414
        %v1416 = vpop.f32.mrf.mxu0
        %v1417 = vadd.f32 %v1388, %v1416
        %1418 = vdwg.mxu0
        %1419 = vmatpush.bf16.msra.mxu0 %v937
        %1420 = vmatpush.bf16.msra.mxu0 %v935
        %1421 = vmatpush.bf16.msra.mxu0 %v933
        %1422 = vmatpush.bf16.msra.mxu0 %v931
        %1423 = vmatpush.bf16.msra.mxu0 %v929
        %1424 = vmatpush.bf16.msra.mxu0 %v927
        %1425 = vmatpush.bf16.msra.mxu0 %v925
        %1426 = vmatpush.bf16.msra.mxu0 %v923
        %1427 = vmatmul.bf16.gmra.mxu0 %v471
        %v1428 = vpop.f32.mrf.mxu0
        %v1429 = vadd.f32 %v1400, %v1428
        %v1430 = vpop.f32.mrf.mxu0
        %v1431 = vadd.f32 %v1402, %v1430
        %1432 = vmatmul.bf16.gmra.mxu0 %v478
        %v1433 = vpop.f32.mrf.mxu0
        %v1434 = vadd.f32 %v1405, %v1433
        %v1435 = vpop.f32.mrf.mxu0
        %v1436 = vadd.f32 %v1407, %v1435
        %1437 = vmatmul.bf16.gmra.mxu0 %v485
        %v1438 = vpop.f32.mrf.mxu0
        %v1439 = vadd.f32 %v1410, %v1438
        %v1440 = vpop.f32.mrf.mxu0
        %v1441 = vadd.f32 %v1412, %v1440
        %1442 = vmatmul.bf16.gmra.mxu0 %v492
        %v1443 = vpop.f32.mrf.mxu0
        %v1444 = vadd.f32 %v1415, %v1443
        %v1445 = vpop.f32.mrf.mxu0
        %v1446 = vadd.f32 %v1417, %v1445
        %1447 = vdwg.mxu0
        %1448 = vmatpush.bf16.msra.mxu0 0
        %1449 = vmatpush.bf16.msra.mxu0 0
        %1450 = vmatpush.bf16.msra.mxu0 %v949
        %1451 = vmatpush.bf16.msra.mxu0 %v947
        %1452 = vmatpush.bf16.msra.mxu0 %v945
        %1453 = vmatpush.bf16.msra.mxu0 %v943
        %1454 = vmatpush.bf16.msra.mxu0 %v941
        %1455 = vmatpush.bf16.msra.mxu0 %v939
        %1456 = vmatmul.bf16.gmra.mxu0 %v1060
        %v1457 = vpop.f32.mrf.mxu0
        %v1458 = vadd.f32 %v1429, %v1457
        %v1459 = vpop.f32.mrf.mxu0
        %v1460 = vadd.f32 %v1431, %v1459
        %1461 = vmatmul.bf16.gmra.mxu0 %v1063
        %v1462 = vpop.f32.mrf.mxu0
        %v1463 = vadd.f32 %v1434, %v1462
        %v1464 = vpop.f32.mrf.mxu0
        %v1465 = vadd.f32 %v1436, %v1464
        %1466 = vmatmul.bf16.gmra.mxu0 %v1066
        %v1467 = vpop.f32.mrf.mxu0
        %v1468 = vadd.f32 %v1439, %v1467
        %v1469 = vpop.f32.mrf.mxu0
        %v1470 = vadd.f32 %v1441, %v1469
        %1471 = vmatmul.bf16.gmra.mxu0 %v1069
        %v1472 = vpop.f32.mrf.mxu0
        %v1473 = vadd.f32 %v1444, %v1472
        %v1474 = vpop.f32.mrf.mxu0
        %v1475 = vadd.f32 %v1446, %v1474
        %1476 = vdwg.mxu0
        %v1477 = vmax.f32 %v1255, 0.0
        %v1478 = vmax.f32 %v1458, 0.0
        %v1479 = vmax.f32 %v1257, 0.0
        %v1480 = vmax.f32 %v1460, 0.0
        %v1481 = vmax.f32 %v1260, 0.0
        %v1482 = vmax.f32 %v1463, 0.0
        %v1483 = vmax.f32 %v1262, 0.0
        %v1484 = vmax.f32 %v1465, 0.0
        %v1485 = vmax.f32 %v1265, 0.0
        %v1486 = vmax.f32 %v1468, 0.0
        %v1487 = vmax.f32 %v1267, 0.0
        %v1488 = vmax.f32 %v1470, 0.0
        %v1489 = vmax.f32 %v1270, 0.0
        %v1490 = vmax.f32 %v1473, 0.0
        %v1491 = vmax.f32 %v1272, 0.0
        %v1492 = vmax.f32 %v1475, 0.0
        %v1493 = vpack.c.bf16 %v1478, %v1477
        %v1494 = vpack.c.bf16 %v1480, %v1479
        %v1495 = vpack.c.bf16 %v1482, %v1481
        %v1496 = vpack.c.bf16 %v1484, %v1483
        %v1497 = vpack.c.bf16 %v1486, %v1485
        %v1498 = vpack.c.bf16 %v1488, %v1487
        %v1499 = vpack.c.bf16 %v1490, %v1489
        %v1500 = vpack.c.bf16 %v1492, %v1491
        %1501 = vst [vmem:[%s210] sm:$0xff] %v1493
        %1502 = vst [vmem:[%s210 + $0x8] sm:$0xff] %v1494
        %1503 = vst [vmem:[%s210 + $0x10] sm:$0xff] %v1495
        %1504 = vst [vmem:[%s210 + $0x18] sm:$0xff] %v1496
        %1505 = vst [vmem:[%s210 + $0x20] sm:$0xff] %v1497
        %1506 = vst [vmem:[%s210 + $0x28] sm:$0xff] %v1498
        %1507 = vst [vmem:[%s210 + $0x30] sm:$0xff] %v1499
        %1508 = vst [vmem:[%s210 + $0x38] sm:$0xff] %v1500
        %s1509 = sand.u32 %s117, 1
        %s1510 = scalar_lea.sflag [#allocation3], %s1509
        %s1511 = sand.u32 %s117, 1
        %s1512 = smul.addr %s1511, 64
        %s1513 = scalar_lea.vmem [#allocation2], %s1512
        // Predicated region
        $region33: #{tpu_custom_call.1} parent=31 // pred_check
          %p1514 = pneg %p127
        $region34: #{tpu_custom_call.1} parent=31 // pred_check_branch
          %1516 = sbr.rel (%p1514) target = $region36
        $region35: #{tpu_custom_call.1} parent=31 // pred_region
          %s1517 = smul.u32 8, %s21
          %s1518 = smul.u32 2, %s22
          %1520 = vsyncadd %s1510, 0
          %s1521 = smul.addr %s1517, 2
          %s1522 = sadd.s32 %s1518, %s1521
          %s1523 = smul.addr %s1522, 4
          %s1524 = scalar_lea.hbm %s3, %s1523
          %s1525 = sshll.u32 %s1513, 4
          %s1526 = int_to_ptr.vmem [resolvable:$true] %s1525
          %s1527 = sshll.u32 %s1524, 4
          %s1528 = int_to_ptr.hbm [resolvable:$true] %s1527
          %1533 = dma.vmem_to_hbm [thread:$0]  %s1526, 1024, %s1528, %s1510, 128, 128, 8
        $region36: #{tpu_custom_call.1} parent=31 // pred_fallthru
          _
      $region32: #{tpu_custom_call.1} parent=5 // pred_fallthru
        _
      %p1534 = scmp.le.s32.totalorder 2, %s12
      // Predicated region
      $region37: #{tpu_custom_call.1} parent=5 // pred_check
        %p1535 = pneg %p1534
      $region38: #{tpu_custom_call.1} parent=5 // pred_check_branch
        %1537 = sbr.rel (%p1535) target = $region40
      $region39: #{tpu_custom_call.1} parent=5 // pred_region
        %s1538 = ssub.s32 %s12, 2
        // Predicated region
        $region41: #{tpu_custom_call.1} parent=39 // pred_check
          %p1539 = pneg %p133
        $region42: #{tpu_custom_call.1} parent=39 // pred_check_branch
          %1541 = sbr.rel (%p1539) target = $region44
        $region43: #{tpu_custom_call.1} parent=39 // pred_region
          %s1542 = sand.u32 %s118, 1
          %s1543 = scalar_lea.sflag [#allocation3], %s1542
          %s1544 = sand.u32 %s118, 1
          %s1545 = smul.addr %s1544, 64
          %s1546 = scalar_lea.vmem [#allocation2], %s1545
          %1548 = dma.done %s1543, 1024
        $region44: #{tpu_custom_call.1} parent=39 // pred_fallthru
          _
      $region40: #{tpu_custom_call.1} parent=5 // pred_fallthru
        _
    $region6: #{tpu_custom_call.1} parent=1 // loop_footer
      %s16 = sadd.s32 1, %s12
    $region7: #{tpu_custom_call.1} parent=1 // loop_footer_branch
      %11 = sbr.rel target = $region3
    $region8: #{tpu_custom_call.1} parent=1 // loop_exit
      _
    %1549 = vsyncpa [#allocation3], 1
    %s1550 = scalar_lea.sflag [#allocation3], 1
    %1551 = vsyncpa %s1550, 1

</llo_original>
